<compile_context>
chip_gen: v7x
topology: tpu7x:2x2x1
jax: 0.10.0
libtpu: 0.0.40
codegen_flags: <defaults>
</compile_context>

<pallas_src>
import jax
import jax.numpy as jnp
from jax.experimental import pallas as pl
from jax.experimental.pallas import tpu as pltpu


def _tpu_generation():
    """Best-effort TPU generation from the device kind string (0 if unknown)."""
    try:
        kind = jax.devices()[0].device_kind.lower()
    except Exception:
        return 0
    for g in (7, 6, 5, 4):
        if f"v{g}" in kind:
            return g
    return 0


def _make_kernel(multi_tile, epi_dtype):
    """Build the fused kernel.

    multi_tile: whether the point axis is split over a second grid dimension
                (adds a VMEM running-max accumulator + init/finalize).
    epi_dtype : dtype of the elementwise epilogue (bf16 on v6e/v7x, f32 on v5e).
    """

    def mlp_and_pool(x_ref, w1_ref, b1_ref, w2_ref, b2_ref, w3_ref):
        bb, tn, d_in = x_ref.shape
        c3 = w3_ref.shape[1]
        # Flatten (BB, TN, D_in) -> (BB*TN, D_in): one big-M matmul per layer.
        x = x_ref[...].reshape(bb * tn, d_in)

        # conv1 (1x1) + bn1 + relu  ->  (M, 64)
        h = jnp.dot(x, w1_ref[...], preferred_element_type=epi_dtype)
        h = jnp.maximum(h + b1_ref[...], 0)
        if h.dtype != jnp.bfloat16:          # f32 epilogue: cast once for the MXU
            h = h.astype(jnp.bfloat16)

        # conv2 (1x1) + bn2 + relu  ->  (M, 128)
        h = jnp.dot(h, w2_ref[...], preferred_element_type=epi_dtype)
        h = jnp.maximum(h + b2_ref[...], 0)
        if h.dtype != jnp.bfloat16:
            h = h.astype(jnp.bfloat16)

        # conv3 (1x1)  ->  (M, 256).  Bias + ReLU are commuted past the
        # max-pool (exact), so the raw dot output feeds the running max.
        h = jnp.dot(h, w3_ref[...], preferred_element_type=epi_dtype)
        return jnp.max(h.reshape(bb, tn, c3), axis=1)          # (BB, 256)

    def finalize(gmax, b3_ref, wp_ref, bp_ref, o_ref):
        # Commuted bn3 bias + ReLU, applied once per batch row (f32).
        g = jnp.maximum(gmax.astype(jnp.float32) + b3_ref[...], 0.0)
        # dropout(p=0.1) in eval mode == identity.
        proj = (jnp.dot(g.astype(jnp.bfloat16), wp_ref[...],
                        preferred_element_type=jnp.float32) + bp_ref[...])
        o_ref[...] = proj[:, None, :].astype(o_ref.dtype)

    if not multi_tile:
        # Common PointNet case (N fits one tile): no scratch, no pl.when.
        def kernel(x_ref, w1_ref, b1_ref, w2_ref, b2_ref, w3_ref, b3_ref,
                   wp_ref, bp_ref, o_ref):
            gmax = mlp_and_pool(x_ref, w1_ref, b1_ref, w2_ref, b2_ref, w3_ref)
            finalize(gmax, b3_ref, wp_ref, bp_ref, o_ref)

        return kernel

    def kernel(x_ref, w1_ref, b1_ref, w2_ref, b2_ref, w3_ref, b3_ref,
               wp_ref, bp_ref, o_ref, gmax_ref):
        j = pl.program_id(1)

        @pl.when(j == 0)
        def _():
            gmax_ref[...] = jnp.full_like(gmax_ref, -jnp.inf)

        tile_max = mlp_and_pool(x_ref, w1_ref, b1_ref, w2_ref, b2_ref, w3_ref)
        gmax_ref[...] = jnp.maximum(gmax_ref[...], tile_max)

        @pl.when(j == pl.num_programs(1) - 1)
        def _():
            finalize(gmax_ref[...], b3_ref, wp_ref, bp_ref, o_ref)

    return kernel


def point_cloud_encoder(x, params, *, bb_max=None, tn_max=None):
    """x: (B, N, D_in) float32  ->  (B, output_dim) float32 (eval-mode forward)."""
    B, N, D_in = x.shape
    w1, b1, w2, b2, w3, b3, wp, bp = params
    c1, c2, c3 = w1.shape[1], w2.shape[1], w3.shape[1]
    out_dim = wp.shape[1]

    gen = _tpu_generation()
    # bf16 elementwise epilogue only where the VALU supports it (v6e/v7x).
    epi_dtype = jnp.bfloat16 if gen >= 6 else jnp.float32

    # Per-generation tile/VMEM defaults.  VMEM budget includes the lane-padded
    # (BB, TN, 3->128) x double-buffers plus the (BB*TN, {64,128,256})
    # intermediates (bf16 on v6e/v7x, f32 on v5e).
    if gen >= 7:
        bb_d, tn_d, vmem_limit = 8, 1024, 40 * 1024 * 1024   # 64 MiB/TC part
    elif gen == 6:
        bb_d, tn_d, vmem_limit = 8, 2048, 64 * 1024 * 1024   # 128 MiB VMEM
    else:
        bb_d, tn_d, vmem_limit = 8, 1024, 64 * 1024 * 1024   # v5e: f32 epilogue
    bb_max = bb_d if bb_max is None else bb_max
    tn_max = tn_d if tn_max is None else tn_max

    # Batch-block size.  On v7x ensure the "parallel" batch axis has >= 2
    # blocks so both TensorCores get work (v5e/v6e have a single TC).
    BB = min(bb_max, B)
    if gen >= 7 and B >= 2:
        BB = min(BB, -(-B // 2))
    B_pad = -(-B // BB) * BB

    # Point-tile size (whole point axis if it fits one tile).
    TN = min(tn_max, N)
    N_pad = -(-N // TN) * TN

    # Pad point axis by edge replication (max-pool invariant); pad batch axis
    # with zeros (padded rows are sliced off at the end).
    if N_pad != N:
        x = jnp.pad(x, ((0, 0), (0, N_pad - N), (0, 0)), mode="edge")
    if B_pad != B:
        x = jnp.pad(x, ((0, B_pad - B), (0, 0), (0, 0)))

    # bf16 operands for the MXU; biases in the epilogue dtype (b1/b2) or f32
    # (b3/bp, applied in the f32 finalize).
    xb = x.astype(jnp.bfloat16)
    w1b, w2b, w3b, wpb = (w.astype(jnp.bfloat16) for w in (w1, w2, w3, wp))
    b1e, b2e = b1.astype(epi_dtype), b2.astype(epi_dtype)
    b3f, bpf = b3.astype(jnp.float32), bp.astype(jnp.float32)

    nb, nn = B_pad // BB, N_pad // TN
    multi_tile = nn > 1
    kernel = _make_kernel(multi_tile, epi_dtype)

    flops = (2 * B_pad * N_pad * (D_in * c1 + c1 * c2 + c2 * c3)
             + 2 * B_pad * c3 * out_dim)
    bytes_accessed = (xb.size * 2
                      + sum(w.size * 2 for w in (w1b, w2b, w3b, wpb))
                      + sum(b.size * b.dtype.itemsize for b in (b1e, b2e, b3f, bpf))
                      + B_pad * out_dim * 4)
    cost = pl.CostEstimate(flops=flops, transcendentals=0,
                           bytes_accessed=bytes_accessed)

    if multi_tile:
        grid = (nb, nn)
        full = lambda arr: pl.BlockSpec(arr.shape, lambda i, j: (0,) * arr.ndim)
        x_spec = pl.BlockSpec((BB, TN, D_in), lambda i, j: (i, j, 0))
        out_spec = pl.BlockSpec((BB, 1, out_dim), lambda i, j: (i, 0, 0))
        scratch = [pltpu.VMEM((BB, c3), epi_dtype)]
        dims = ("parallel", "arbitrary")
    else:
        grid = (nb,)
        full = lambda arr: pl.BlockSpec(arr.shape, lambda i: (0,) * arr.ndim)
        x_spec = pl.BlockSpec((BB, TN, D_in), lambda i: (i, 0, 0))
        out_spec = pl.BlockSpec((BB, 1, out_dim), lambda i: (i, 0, 0))
        scratch = []
        dims = ("parallel",)

    out = pl.pallas_call(
        kernel,
        out_shape=jax.ShapeDtypeStruct((B_pad, 1, out_dim), jnp.float32),
        grid_spec=pltpu.PrefetchScalarGridSpec(
            num_scalar_prefetch=0,
            grid=grid,
            in_specs=[x_spec,
                      full(w1b), full(b1e),
                      full(w2b), full(b2e),
                      full(w3b), full(b3f),
                      full(wpb), full(bpf)],
            out_specs=out_spec,
            scratch_shapes=scratch),
        compiler_params=pltpu.CompilerParams(
            dimension_semantics=dims,
            vmem_limit_bytes=vmem_limit),
        cost_estimate=cost,
    )(xb, w1b, b1e, w2b, b2e, w3b, b3f, wpb, bpf)

    return out.reshape(B_pad, out_dim)[:B]


def init_params(key, input_dim=3, output_dim=256):
    """PyTorch-default-style init (uniform +/- 1/sqrt(fan_in)), with eval-mode
    BatchNorm folded into each conv's weight/bias."""
    eps = 1e-5

    def linear_init(k, fan_in, fan_out):
        kw, kb = jax.random.split(k)
        bound = 1.0 / jnp.sqrt(float(fan_in))
        w = jax.random.uniform(kw, (fan_in, fan_out), jnp.float32, -bound, bound)
        b = jax.random.uniform(kb, (1, fan_out), jnp.float32, -bound, bound)
        return w, b

    def fold_bn(w, b, c):
        # gamma=1, beta=0, running_mean=0, running_var=1 at init
        gamma = jnp.ones((c,), jnp.float32)
        beta = jnp.zeros((c,), jnp.float32)
        mean = jnp.zeros((c,), jnp.float32)
        var = jnp.ones((c,), jnp.float32)
        scale = gamma / jnp.sqrt(var + eps)
        return w * scale[None, :], (b - mean[None, :]) * scale[None, :] + beta[None, :]

    k1, k2, k3, k4 = jax.random.split(key, 4)
    w1, b1 = linear_init(k1, input_dim, 64)
    w2, b2 = linear_init(k2, 64, 128)
    w3, b3 = linear_init(k3, 128, 256)
    wp, bp = linear_init(k4, 256, output_dim)

    w1, b1 = fold_bn(w1, b1, 64)
    w2, b2 = fold_bn(w2, b2, 128)
    w3, b3 = fold_bn(w3, b3, 256)
    return (w1, b1, w2, b2, w3, b3, wp, bp)


def reference_forward(x, params):
    """Pure-JAX reference: bf16 MXU operands, f32 accumulate/elementwise."""
    w1, b1, w2, b2, w3, b3, wp, bp = params
    bf = lambda a: a.astype(jnp.bfloat16).astype(jnp.float32)
    h = jnp.maximum(bf(x) @ bf(w1) + b1, 0.0)
    h = jnp.maximum(bf(h) @ bf(w2) + b2, 0.0)
    h = jnp.maximum(bf(h) @ bf(w3) + b3, 0.0)
    g = jnp.max(h, axis=1)
    return bf(g) @ bf(wp) + bp[0]


if __name__ == "__main__":
    key = jax.random.PRNGKey(0)
    k_param, k_x = jax.random.split(key)

    B, N, D_IN, OUT = 2, 128, 3, 256
    params = init_params(k_param, input_dim=D_IN, output_dim=OUT)
    x = jax.random.normal(k_x, (B, N, D_IN), jnp.float32)

    ref = reference_forward(x, params)
    # bf16 epilogue (v6e/v7x) moves the rounding point of bias/ReLU/max; widen
    # the tolerance accordingly.  f32 epilogue (v5e/older) matches tightly.
    tol = 3e-2 if _tpu_generation() >= 6 else 5e-3

    # 1) Common path: whole point axis in one tile (1-D grid, no scratch).
    out = jax.block_until_ready(point_cloud_encoder(x, params))
    assert out.shape == (B, OUT), out.shape
    assert jnp.allclose(out, ref, atol=tol, rtol=tol), "mismatch (single-tile)"

    # 2) Point-tiled path: force two point tiles to exercise the running-max
    #    accumulator + init/finalize.
    out2 = jax.block_until_ready(point_cloud_encoder(x, params, tn_max=64))
    assert out2.shape == (B, OUT), out2.shape
    assert jnp.allclose(out2, ref, atol=tol, rtol=tol), "mismatch (multi-tile)"

    print("KERNEL_OK")
</pallas_src>

<mosaic_0001>
module attributes {stable_mosaic.version = 11 : i64} {
  func.func @kernel(%arg0: i32, %arg1: memref<2x128x3xbf16, #tpu.memory_space<vmem>>, %arg2: memref<3x64xbf16, #tpu.memory_space<vmem>>, %arg3: memref<1x64xf32, #tpu.memory_space<vmem>>, %arg4: memref<64x128xbf16, #tpu.memory_space<vmem>>, %arg5: memref<1x128xf32, #tpu.memory_space<vmem>>, %arg6: memref<128x256xbf16, #tpu.memory_space<vmem>>, %arg7: memref<1x256xf32, #tpu.memory_space<vmem>>, %arg8: memref<256x256xbf16, #tpu.memory_space<vmem>>, %arg9: memref<1x256xf32, #tpu.memory_space<vmem>>, %arg10: memref<2x1x256xf32, #tpu.memory_space<vmem>>) attributes {dimension_semantics = [#tpu.dimension_semantics<parallel>], iteration_bounds = array<i64: 1>, scalar_prefetch = 0 : i64, scratch_operands = 0 : i64, tpu.core_type = #tpu.core_type<tc>, window_params = [{transform_indices = @transform_0, window_bounds = array<i64: 2, 128, 3>}, {pipeline_mode = #tpu.pipeline_mode<synchronous>, transform_indices = @transform_1, window_bounds = array<i64: 3, 64>}, {pipeline_mode = #tpu.pipeline_mode<synchronous>, transform_indices = @transform_2, window_bounds = array<i64: 1, 64>}, {pipeline_mode = #tpu.pipeline_mode<synchronous>, transform_indices = @transform_3, window_bounds = array<i64: 64, 128>}, {pipeline_mode = #tpu.pipeline_mode<synchronous>, transform_indices = @transform_4, window_bounds = array<i64: 1, 128>}, {pipeline_mode = #tpu.pipeline_mode<synchronous>, transform_indices = @transform_5, window_bounds = array<i64: 128, 256>}, {pipeline_mode = #tpu.pipeline_mode<synchronous>, transform_indices = @transform_6, window_bounds = array<i64: 1, 256>}, {pipeline_mode = #tpu.pipeline_mode<synchronous>, transform_indices = @transform_7, window_bounds = array<i64: 256, 256>}, {pipeline_mode = #tpu.pipeline_mode<synchronous>, transform_indices = @transform_8, window_bounds = array<i64: 1, 256>}, {transform_indices = @transform_9, window_bounds = array<i64: 2, 1, 256>}]} {
    %c0 = arith.constant 0 : index
    %c0_0 = arith.constant 0 : index
    %c0_1 = arith.constant 0 : index
    %0 = vector.load %arg1[%c0, %c0_0, %c0_1] : memref<2x128x3xbf16, #tpu.memory_space<vmem>>, vector<2x128x3xbf16>
    %1 = vector.shape_cast %0 : vector<2x128x3xbf16> to vector<256x3xbf16>
    %c0_2 = arith.constant 0 : index
    %c0_3 = arith.constant 0 : index
    %2 = vector.load %arg2[%c0_2, %c0_3] : memref<3x64xbf16, #tpu.memory_space<vmem>>, vector<3x64xbf16>
    %cst = arith.constant dense<0.000000e+00> : vector<256x64xf32>
    %3 = tpu.matmul %1, %2, %cst {dimension_numbers = #tpu.dot_dimension_numbers<[1], [0], [0], [1], [0, 0, 1, 1], [], []>} : vector<256x3xbf16>, vector<3x64xbf16>, vector<256x64xf32> -> vector<256x64xf32>
    %c0_4 = arith.constant 0 : index
    %c0_5 = arith.constant 0 : index
    %4 = vector.load %arg3[%c0_4, %c0_5] : memref<1x64xf32, #tpu.memory_space<vmem>>, vector<1x64xf32>
    %5 = vector.broadcast %4 : vector<1x64xf32> to vector<256x64xf32>
    %6 = arith.addf %3, %5 : vector<256x64xf32>
    %cst_6 = arith.constant 0.000000e+00 : f32
    %7 = vector.broadcast %cst_6 : f32 to vector<256x64xf32>
    %8 = arith.maximumf %6, %7 : vector<256x64xf32>
    %9 = arith.truncf %8 : vector<256x64xf32> to vector<256x64xbf16>
    %c0_7 = arith.constant 0 : index
    %c0_8 = arith.constant 0 : index
    %10 = vector.load %arg4[%c0_7, %c0_8] : memref<64x128xbf16, #tpu.memory_space<vmem>>, vector<64x128xbf16>
    %cst_9 = arith.constant dense<0.000000e+00> : vector<256x128xf32>
    %11 = tpu.matmul %9, %10, %cst_9 {dimension_numbers = #tpu.dot_dimension_numbers<[1], [0], [0], [1], [0, 0, 1, 1], [], []>} : vector<256x64xbf16>, vector<64x128xbf16>, vector<256x128xf32> -> vector<256x128xf32>
    %c0_10 = arith.constant 0 : index
    %c0_11 = arith.constant 0 : index
    %12 = vector.load %arg5[%c0_10, %c0_11] : memref<1x128xf32, #tpu.memory_space<vmem>>, vector<1x128xf32>
    %13 = vector.broadcast %12 : vector<1x128xf32> to vector<256x128xf32>
    %14 = arith.addf %11, %13 : vector<256x128xf32>
    %cst_12 = arith.constant 0.000000e+00 : f32
    %15 = vector.broadcast %cst_12 : f32 to vector<256x128xf32>
    %16 = arith.maximumf %14, %15 : vector<256x128xf32>
    %17 = arith.truncf %16 : vector<256x128xf32> to vector<256x128xbf16>
    %c0_13 = arith.constant 0 : index
    %c0_14 = arith.constant 0 : index
    %18 = vector.load %arg6[%c0_13, %c0_14] : memref<128x256xbf16, #tpu.memory_space<vmem>>, vector<128x256xbf16>
    %cst_15 = arith.constant dense<0.000000e+00> : vector<256x256xf32>
    %19 = tpu.matmul %17, %18, %cst_15 {dimension_numbers = #tpu.dot_dimension_numbers<[1], [0], [0], [1], [0, 0, 1, 1], [], []>} : vector<256x128xbf16>, vector<128x256xbf16>, vector<256x256xf32> -> vector<256x256xf32>
    %20 = vector.shape_cast %19 : vector<256x256xf32> to vector<2x128x256xf32>
    %cst_16 = arith.constant dense<0xFF800000> : vector<2x256xf32>
    %21 = vector.multi_reduction <maximumf>, %20, %cst_16 [1] : vector<2x128x256xf32> to vector<2x256xf32>
    %c0_17 = arith.constant 0 : index
    %c0_18 = arith.constant 0 : index
    %22 = vector.load %arg7[%c0_17, %c0_18] : memref<1x256xf32, #tpu.memory_space<vmem>>, vector<1x256xf32>
    %23 = vector.broadcast %22 : vector<1x256xf32> to vector<2x256xf32>
    %24 = arith.addf %21, %23 : vector<2x256xf32>
    %cst_19 = arith.constant 0.000000e+00 : f32
    %25 = vector.broadcast %cst_19 : f32 to vector<2x256xf32>
    %26 = arith.maximumf %24, %25 : vector<2x256xf32>
    %27 = arith.truncf %26 : vector<2x256xf32> to vector<2x256xbf16>
    %c0_20 = arith.constant 0 : index
    %c0_21 = arith.constant 0 : index
    %28 = vector.load %arg8[%c0_20, %c0_21] : memref<256x256xbf16, #tpu.memory_space<vmem>>, vector<256x256xbf16>
    %cst_22 = arith.constant dense<0.000000e+00> : vector<2x256xf32>
    %29 = tpu.matmul %27, %28, %cst_22 {dimension_numbers = #tpu.dot_dimension_numbers<[1], [0], [0], [1], [0, 0, 1, 1], [], []>} : vector<2x256xbf16>, vector<256x256xbf16>, vector<2x256xf32> -> vector<2x256xf32>
    %c0_23 = arith.constant 0 : index
    %c0_24 = arith.constant 0 : index
    %30 = vector.load %arg9[%c0_23, %c0_24] : memref<1x256xf32, #tpu.memory_space<vmem>>, vector<1x256xf32>
    %31 = vector.broadcast %30 : vector<1x256xf32> to vector<2x256xf32>
    %32 = arith.addf %29, %31 : vector<2x256xf32>
    %33 = vector.shape_cast %32 : vector<2x256xf32> to vector<2x1x256xf32>
    %c0_25 = arith.constant 0 : index
    %c0_26 = arith.constant 0 : index
    %c0_27 = arith.constant 0 : index
    %34 = vector.load %arg10[%c0_25, %c0_26, %c0_27] : memref<2x1x256xf32, #tpu.memory_space<vmem>>, vector<2x1x256xf32>
    tpu.vector_store %arg10[%c0_25, %c0_26, %c0_27], %33 {strides = array<i32>} : memref<2x1x256xf32, #tpu.memory_space<vmem>>, vector<2x1x256xf32>,
    return
  }
  func.func @transform_0(%arg0: i32) -> (i32, i32, i32) {
    %c0_i32 = arith.constant 0 : i32
    %c0_i32_0 = arith.constant 0 : i32
    %c0_i32_1 = arith.constant 0 : i32
    return %arg0, %c0_i32, %c0_i32_0 : i32, i32, i32
  }
  func.func @transform_1(%arg0: i32) -> (i32, i32) {
    %c0_i32 = arith.constant 0 : i32
    %c0_i32_0 = arith.constant 0 : i32
    %c0_i32_1 = arith.constant 0 : i32
    return %c0_i32, %c0_i32_0 : i32, i32
  }
  func.func @transform_2(%arg0: i32) -> (i32, i32) {
    %c0_i32 = arith.constant 0 : i32
    %c0_i32_0 = arith.constant 0 : i32
    %c0_i32_1 = arith.constant 0 : i32
    return %c0_i32, %c0_i32_0 : i32, i32
  }
  func.func @transform_3(%arg0: i32) -> (i32, i32) {
    %c0_i32 = arith.constant 0 : i32
    %c0_i32_0 = arith.constant 0 : i32
    %c0_i32_1 = arith.constant 0 : i32
    return %c0_i32, %c0_i32_0 : i32, i32
  }
  func.func @transform_4(%arg0: i32) -> (i32, i32) {
    %c0_i32 = arith.constant 0 : i32
    %c0_i32_0 = arith.constant 0 : i32
    %c0_i32_1 = arith.constant 0 : i32
    return %c0_i32, %c0_i32_0 : i32, i32
  }
  func.func @transform_5(%arg0: i32) -> (i32, i32) {
    %c0_i32 = arith.constant 0 : i32
    %c0_i32_0 = arith.constant 0 : i32
    %c0_i32_1 = arith.constant 0 : i32
    return %c0_i32, %c0_i32_0 : i32, i32
  }
  func.func @transform_6(%arg0: i32) -> (i32, i32) {
    %c0_i32 = arith.constant 0 : i32
    %c0_i32_0 = arith.constant 0 : i32
    %c0_i32_1 = arith.constant 0 : i32
    return %c0_i32, %c0_i32_0 : i32, i32
  }
  func.func @transform_7(%arg0: i32) -> (i32, i32) {
    %c0_i32 = arith.constant 0 : i32
    %c0_i32_0 = arith.constant 0 : i32
    %c0_i32_1 = arith.constant 0 : i32
    return %c0_i32, %c0_i32_0 : i32, i32
  }
  func.func @transform_8(%arg0: i32) -> (i32, i32) {
    %c0_i32 = arith.constant 0 : i32
    %c0_i32_0 = arith.constant 0 : i32
    %c0_i32_1 = arith.constant 0 : i32
    return %c0_i32, %c0_i32_0 : i32, i32
  }
  func.func @transform_9(%arg0: i32) -> (i32, i32, i32) {
    %c0_i32 = arith.constant 0 : i32
    %c0_i32_0 = arith.constant 0 : i32
    %c0_i32_1 = arith.constant 0 : i32
    return %arg0, %c0_i32, %c0_i32_0 : i32, i32, i32
  }
}

</mosaic_0001>

<llo_original>
// kernel: tpu_custom_call.1
$region0: #{tpu_custom_call.1}
  #allocation0 [shape = 'u32[]', space=smem, size = 0x4, offset = 0x4, fixed_abs, tag = 'smem constant byte address 0x4 - core index']
  #allocation1 [shape = 'u32[144,128]{1,0:T(1,128)}', space=vmem, size = 0x12000, scoped, tag = 'internal scratch']
  %s0 = inlined_call_operand.hbm [shape: bf16[2,128,3], index: 0, kind: input, shape index: {}]
  %s1 = inlined_call_operand.hbm [shape: bf16[3,64], index: 1, kind: input, shape index: {}]
  %s2 = inlined_call_operand.hbm [shape: f32[1,64], index: 2, kind: input, shape index: {}]
  %s3 = inlined_call_operand.hbm [shape: bf16[64,128], index: 3, kind: input, shape index: {}]
  %s4 = inlined_call_operand.hbm [shape: f32[1,128], index: 4, kind: input, shape index: {}]
  %s5 = inlined_call_operand.hbm [shape: bf16[128,256], index: 5, kind: input, shape index: {}]
  %s6 = inlined_call_operand.hbm [shape: f32[1,256], index: 6, kind: input, shape index: {}]
  %s7 = inlined_call_operand.hbm [shape: bf16[256,256], index: 7, kind: input, shape index: {}]
  %s8 = inlined_call_operand.hbm [shape: f32[1,256], index: 8, kind: input, shape index: {}]
  %s9 = inlined_call_operand.hbm [shape: f32[2,1,256], index: 9, kind: output, shape index: {}]
  %s10 = sld [smem:[#allocation0]]
  $region82: #{tpu_custom_call.1} parent=0
    _
  %s12 = ssub.s32 1, %s10
  %s13 = scalar_select 0, %s12, %s10
  $region1: #{tpu_custom_call.1} parent=0
    #allocation2 [shape = 'u8[65536]{0}', space=vmem, size = 0x10000, scoped, tag = 'input window, operand 0, single buffered']
    #allocation3 [shape = 's32[1]{0}', space=sflag, size = 0x4, scoped, tag = 'scoped memory for tpu_custom_call.1']
    #allocation4 [shape = 's32[1]{0}', space=sflag, size = 0x4, scoped, tag = 'scoped memory for tpu_custom_call.1']
    #allocation5 [shape = 'u8[1024]{0}', space=vmem, size = 0x400, scoped, tag = 'input window, operand 1, single buffered']
    #allocation6 [shape = 's32[1]{0}', space=sflag, size = 0x4, scoped, tag = 'scoped memory for tpu_custom_call.1']
    #allocation7 [shape = 'u8[512]{0}', space=vmem, size = 0x400, scoped, tag = 'input window, operand 2, single buffered']
    #allocation8 [shape = 'u8[16384]{0}', space=vmem, size = 0x4000, scoped, tag = 'input window, operand 3, single buffered']
    #allocation9 [shape = 's32[1]{0}', space=sflag, size = 0x4, scoped, tag = 'scoped memory for tpu_custom_call.1']
    #allocation10 [shape = 'u8[512]{0}', space=vmem, size = 0x400, scoped, tag = 'input window, operand 4, single buffered']
    #allocation11 [shape = 'u8[65536]{0}', space=vmem, size = 0x10000, scoped, tag = 'input window, operand 5, single buffered']
    #allocation12 [shape = 's32[1]{0}', space=sflag, size = 0x4, scoped, tag = 'scoped memory for tpu_custom_call.1']
    #allocation13 [shape = 'u8[1024]{0}', space=vmem, size = 0x400, scoped, tag = 'input window, operand 6, single buffered']
    #allocation14 [shape = 'u8[131072]{0}', space=vmem, size = 0x20000, scoped, tag = 'input window, operand 7, single buffered']
    #allocation15 [shape = 's32[1]{0}', space=sflag, size = 0x4, scoped, tag = 'scoped memory for tpu_custom_call.1']
    #allocation16 [shape = 'u8[1024]{0}', space=vmem, size = 0x400, scoped, tag = 'input window, operand 8, single buffered']
    #allocation17 [shape = 'u8[2048]{0}', space=vmem, size = 0x800, scoped, tag = 'output window, operand 0, single buffered']
    %14 = vsyncpa [#allocation3], 0
    %15 = vsyncpa [#allocation6], 0
    %16 = vsyncpa [#allocation9], 0
    %17 = vsyncpa [#allocation12], 0
    %18 = vsyncpa [#allocation15], 0
    %19 = vsyncpa [#allocation4], 0
    // Predicated region
    $region2: #{tpu_custom_call.1} parent=1 // pred_check
      _
    $region3: #{tpu_custom_call.1} parent=1 // pred_check_branch
      %21 = sbr.rel (0) target = $region5
    $region4: #{tpu_custom_call.1} parent=1 // pred_region
      %s23 = ssub.s32 2048, 2048
      %24 = vsyncadd [#allocation3], %s23
      %s25 = sshll.u32 [#allocation2], 4
      %s26 = int_to_ptr.vmem [resolvable:$true] %s25
      %31 = dma.hbm_to_vmem [thread:$0]  %s0, 2048, %s26, [#allocation3], 64, 64, 4
    $region5: #{tpu_custom_call.1} parent=1 // pred_fallthru
      _
    // Predicated region
    $region6: #{tpu_custom_call.1} parent=1 // pred_check
      _
    $region7: #{tpu_custom_call.1} parent=1 // pred_check_branch
      %33 = sbr.rel (0) target = $region9
    $region8: #{tpu_custom_call.1} parent=1 // pred_region
      %s35 = ssub.s32 32, 32
      %36 = vsyncadd [#allocation6], %s35
      %s38 = sshll.u32 [#allocation5], 4
      %s39 = int_to_ptr.vmem [resolvable:$true] %s38
      %41 = dma.hbm_to_vmem [thread:$0]  %s1, 32, %s39, [#allocation6]
    $region9: #{tpu_custom_call.1} parent=1 // pred_fallthru
      _
    // Predicated region
    $region10: #{tpu_custom_call.1} parent=1 // pred_check
      _
    $region11: #{tpu_custom_call.1} parent=1 // pred_check_branch
      %43 = sbr.rel (0) target = $region13
    $region12: #{tpu_custom_call.1} parent=1 // pred_region
      %s45 = ssub.s32 16, 16
      %46 = vsyncadd [#allocation6], %s45
      %s48 = sshll.u32 [#allocation7], 4
      %s49 = int_to_ptr.vmem [resolvable:$true] %s48
      %51 = dma.hbm_to_vmem [thread:$0]  %s2, 16, %s49, [#allocation6]
    $region13: #{tpu_custom_call.1} parent=1 // pred_fallthru
      _
    // Predicated region
    $region14: #{tpu_custom_call.1} parent=1 // pred_check
      _
    $region15: #{tpu_custom_call.1} parent=1 // pred_check_branch
      %53 = sbr.rel (0) target = $region17
    $region16: #{tpu_custom_call.1} parent=1 // pred_region
      %s55 = ssub.s32 512, 512
      %56 = vsyncadd [#allocation9], %s55
      %s57 = sshll.u32 [#allocation8], 4
      %s58 = int_to_ptr.vmem [resolvable:$true] %s57
      %63 = dma.hbm_to_vmem [thread:$0]  %s3, 512, %s58, [#allocation9], 64, 64, 4
    $region17: #{tpu_custom_call.1} parent=1 // pred_fallthru
      _
    // Predicated region
    $region18: #{tpu_custom_call.1} parent=1 // pred_check
      _
    $region19: #{tpu_custom_call.1} parent=1 // pred_check_branch
      %65 = sbr.rel (0) target = $region21
    $region20: #{tpu_custom_call.1} parent=1 // pred_region
      %s67 = ssub.s32 16, 16
      %68 = vsyncadd [#allocation9], %s67
      %s70 = sshll.u32 [#allocation10], 4
      %s71 = int_to_ptr.vmem [resolvable:$true] %s70
      %73 = dma.hbm_to_vmem [thread:$0]  %s4, 16, %s71, [#allocation9]
    $region21: #{tpu_custom_call.1} parent=1 // pred_fallthru
      _
    // Predicated region
    $region22: #{tpu_custom_call.1} parent=1 // pred_check
      _
    $region23: #{tpu_custom_call.1} parent=1 // pred_check_branch
      %75 = sbr.rel (0) target = $region25
    $region24: #{tpu_custom_call.1} parent=1 // pred_region
      %s77 = ssub.s32 2048, 2048
      %78 = vsyncadd [#allocation12], %s77
      %s79 = sshll.u32 [#allocation11], 4
      %s80 = int_to_ptr.vmem [resolvable:$true] %s79
      %85 = dma.hbm_to_vmem [thread:$0]  %s5, 2048, %s80, [#allocation12], 128, 128, 8
    $region25: #{tpu_custom_call.1} parent=1 // pred_fallthru
      _
    // Predicated region
    $region26: #{tpu_custom_call.1} parent=1 // pred_check
      _
    $region27: #{tpu_custom_call.1} parent=1 // pred_check_branch
      %87 = sbr.rel (0) target = $region29
    $region28: #{tpu_custom_call.1} parent=1 // pred_region
      %s89 = ssub.s32 32, 32
      %90 = vsyncadd [#allocation12], %s89
      %s92 = sshll.u32 [#allocation13], 4
      %s93 = int_to_ptr.vmem [resolvable:$true] %s92
      %95 = dma.hbm_to_vmem [thread:$0]  %s6, 32, %s93, [#allocation12]
    $region29: #{tpu_custom_call.1} parent=1 // pred_fallthru
      _
    // Predicated region
    $region30: #{tpu_custom_call.1} parent=1 // pred_check
      _
    $region31: #{tpu_custom_call.1} parent=1 // pred_check_branch
      %97 = sbr.rel (0) target = $region33
    $region32: #{tpu_custom_call.1} parent=1 // pred_region
      %s99 = ssub.s32 4096, 4096
      %100 = vsyncadd [#allocation15], %s99
      %s101 = sshll.u32 [#allocation14], 4
      %s102 = int_to_ptr.vmem [resolvable:$true] %s101
      %107 = dma.hbm_to_vmem [thread:$0]  %s7, 4096, %s102, [#allocation15], 128, 128, 8
    $region33: #{tpu_custom_call.1} parent=1 // pred_fallthru
      _
    // Predicated region
    $region34: #{tpu_custom_call.1} parent=1 // pred_check
      _
    $region35: #{tpu_custom_call.1} parent=1 // pred_check_branch
      %109 = sbr.rel (0) target = $region37
    $region36: #{tpu_custom_call.1} parent=1 // pred_region
      %s111 = ssub.s32 32, 32
      %112 = vsyncadd [#allocation15], %s111
      %s114 = sshll.u32 [#allocation16], 4
      %s115 = int_to_ptr.vmem [resolvable:$true] %s114
      %117 = dma.hbm_to_vmem [thread:$0]  %s8, 32, %s115, [#allocation15]
    $region37: #{tpu_custom_call.1} parent=1 // pred_fallthru
      _
    // Predicated region
    $region38: #{tpu_custom_call.1} parent=1 // pred_check
      _
    $region39: #{tpu_custom_call.1} parent=1 // pred_check_branch
      %119 = sbr.rel (0) target = $region41
    $region40: #{tpu_custom_call.1} parent=1 // pred_region
      %120 = dma.done [#allocation3], 2048
    $region41: #{tpu_custom_call.1} parent=1 // pred_fallthru
      _
    // Predicated region
    $region42: #{tpu_custom_call.1} parent=1 // pred_check
      _
    $region43: #{tpu_custom_call.1} parent=1 // pred_check_branch
      %122 = sbr.rel (0) target = $region45
    $region44: #{tpu_custom_call.1} parent=1 // pred_region
      %123 = dma.done [#allocation6], 32
    $region45: #{tpu_custom_call.1} parent=1 // pred_fallthru
      _
    // Predicated region
    $region46: #{tpu_custom_call.1} parent=1 // pred_check
      _
    $region47: #{tpu_custom_call.1} parent=1 // pred_check_branch
      %125 = sbr.rel (0) target = $region49
    $region48: #{tpu_custom_call.1} parent=1 // pred_region
      %126 = dma.done [#allocation6], 16
    $region49: #{tpu_custom_call.1} parent=1 // pred_fallthru
      _
    // Predicated region
    $region50: #{tpu_custom_call.1} parent=1 // pred_check
      _
    $region51: #{tpu_custom_call.1} parent=1 // pred_check_branch
      %128 = sbr.rel (0) target = $region53
    $region52: #{tpu_custom_call.1} parent=1 // pred_region
      %129 = dma.done [#allocation9], 512
    $region53: #{tpu_custom_call.1} parent=1 // pred_fallthru
      _
    // Predicated region
    $region54: #{tpu_custom_call.1} parent=1 // pred_check
      _
    $region55: #{tpu_custom_call.1} parent=1 // pred_check_branch
      %131 = sbr.rel (0) target = $region57
    $region56: #{tpu_custom_call.1} parent=1 // pred_region
      %132 = dma.done [#allocation9], 16
    $region57: #{tpu_custom_call.1} parent=1 // pred_fallthru
      _
    // Predicated region
    $region58: #{tpu_custom_call.1} parent=1 // pred_check
      _
    $region59: #{tpu_custom_call.1} parent=1 // pred_check_branch
      %134 = sbr.rel (0) target = $region61
    $region60: #{tpu_custom_call.1} parent=1 // pred_region
      %135 = dma.done [#allocation12], 2048
    $region61: #{tpu_custom_call.1} parent=1 // pred_fallthru
      _
    // Predicated region
    $region62: #{tpu_custom_call.1} parent=1 // pred_check
      _
    $region63: #{tpu_custom_call.1} parent=1 // pred_check_branch
      %137 = sbr.rel (0) target = $region65
    $region64: #{tpu_custom_call.1} parent=1 // pred_region
      %138 = dma.done [#allocation12], 32
    $region65: #{tpu_custom_call.1} parent=1 // pred_fallthru
      _
    // Predicated region
    $region66: #{tpu_custom_call.1} parent=1 // pred_check
      _
    $region67: #{tpu_custom_call.1} parent=1 // pred_check_branch
      %140 = sbr.rel (0) target = $region69
    $region68: #{tpu_custom_call.1} parent=1 // pred_region
      %141 = dma.done [#allocation15], 4096
    $region69: #{tpu_custom_call.1} parent=1 // pred_fallthru
      _
    // Predicated region
    $region70: #{tpu_custom_call.1} parent=1 // pred_check
      _
    $region71: #{tpu_custom_call.1} parent=1 // pred_check_branch
      %143 = sbr.rel (0) target = $region73
    $region72: #{tpu_custom_call.1} parent=1 // pred_region
      %144 = dma.done [#allocation15], 32
    $region73: #{tpu_custom_call.1} parent=1 // pred_fallthru
      _
    %v146 = vld [vmem:[#allocation2] sm:$0xf]
    %v147 = vld [vmem:[#allocation2 + $0x4] sm:$0xf]
    %v148 = vld [vmem:[#allocation2 + $0x8] sm:$0xf]
    %v149 = vld [vmem:[#allocation2 + $0xc] sm:$0xf]
    %v150 = vld [vmem:[#allocation2 + $0x10] sm:$0xf]
    %v151 = vld [vmem:[#allocation2 + $0x14] sm:$0xf]
    %v152 = vld [vmem:[#allocation2 + $0x18] sm:$0xf]
    %v153 = vld [vmem:[#allocation2 + $0x1c] sm:$0xf]
    %v154 = vld [vmem:[#allocation2 + $0x20] sm:$0xf]
    %v155 = vld [vmem:[#allocation2 + $0x24] sm:$0xf]
    %v156 = vld [vmem:[#allocation2 + $0x28] sm:$0xf]
    %v157 = vld [vmem:[#allocation2 + $0x2c] sm:$0xf]
    %v158 = vld [vmem:[#allocation2 + $0x30] sm:$0xf]
    %v159 = vld [vmem:[#allocation2 + $0x34] sm:$0xf]
    %v160 = vld [vmem:[#allocation2 + $0x38] sm:$0xf]
    %v161 = vld [vmem:[#allocation2 + $0x3c] sm:$0xf]
    %v162 = vld [vmem:[#allocation2 + $0x40] sm:$0xf]
    %v163 = vld [vmem:[#allocation2 + $0x44] sm:$0xf]
    %v164 = vld [vmem:[#allocation2 + $0x48] sm:$0xf]
    %v165 = vld [vmem:[#allocation2 + $0x4c] sm:$0xf]
    %v166 = vld [vmem:[#allocation2 + $0x50] sm:$0xf]
    %v167 = vld [vmem:[#allocation2 + $0x54] sm:$0xf]
    %v168 = vld [vmem:[#allocation2 + $0x58] sm:$0xf]
    %v169 = vld [vmem:[#allocation2 + $0x5c] sm:$0xf]
    %v170 = vld [vmem:[#allocation2 + $0x60] sm:$0xf]
    %v171 = vld [vmem:[#allocation2 + $0x64] sm:$0xf]
    %v172 = vld [vmem:[#allocation2 + $0x68] sm:$0xf]
    %v173 = vld [vmem:[#allocation2 + $0x6c] sm:$0xf]
    %v174 = vld [vmem:[#allocation2 + $0x70] sm:$0xf]
    %v175 = vld [vmem:[#allocation2 + $0x74] sm:$0xf]
    %v176 = vld [vmem:[#allocation2 + $0x78] sm:$0xf]
    %v177 = vld [vmem:[#allocation2 + $0x7c] sm:$0xf]
    %v178 = vld [vmem:[#allocation5] sm:$0x3]
    %v179 = vld [vmem:[#allocation7] sm:$0x1]
    %v181 = vlaneseq
    %v182 = vshrl.u32 %v181, 7
    %v183 = vsub.s32 0, %v182
    %v184 = vrot.slane %v179, %v183
    %v218 = vunpack.c.l.b16 %v146
    %v219 = vunpack.c.l.b16 %v147
    %v220 = vunpack.c.l.b16 %v148
    %v221 = vunpack.c.l.b16 %v149
    %v222 = vunpack.c.l.b16 %v150
    %v223 = vunpack.c.l.b16 %v151
    %v224 = vunpack.c.l.b16 %v152
    %v225 = vunpack.c.l.b16 %v153
    %v226 = vunpack.c.l.b16 %v154
    %v227 = vunpack.c.l.b16 %v155
    %v228 = vunpack.c.l.b16 %v156
    %v229 = vunpack.c.l.b16 %v157
    %v230 = vunpack.c.l.b16 %v158
    %v231 = vunpack.c.l.b16 %v159
    %v232 = vunpack.c.l.b16 %v160
    %v233 = vunpack.c.l.b16 %v161
    %v234 = vunpack.c.l.b16 %v162
    %v235 = vunpack.c.l.b16 %v163
    %v236 = vunpack.c.l.b16 %v164
    %v237 = vunpack.c.l.b16 %v165
    %v238 = vunpack.c.l.b16 %v166
    %v239 = vunpack.c.l.b16 %v167
    %v240 = vunpack.c.l.b16 %v168
    %v241 = vunpack.c.l.b16 %v169
    %v242 = vunpack.c.l.b16 %v170
    %v243 = vunpack.c.l.b16 %v171
    %v244 = vunpack.c.l.b16 %v172
    %v245 = vunpack.c.l.b16 %v173
    %v246 = vunpack.c.l.b16 %v174
    %v247 = vunpack.c.l.b16 %v175
    %v248 = vunpack.c.l.b16 %v176
    %v249 = vunpack.c.l.b16 %v177
    %v250 = vpack.c.b16 %v219, %v218
    %v251 = vpack.c.b16 %v221, %v220
    %v252 = vpack.c.b16 %v223, %v222
    %v253 = vpack.c.b16 %v225, %v224
    %v254 = vpack.c.b16 %v227, %v226
    %v255 = vpack.c.b16 %v229, %v228
    %v256 = vpack.c.b16 %v231, %v230
    %v257 = vpack.c.b16 %v233, %v232
    %v258 = vpack.c.b16 %v235, %v234
    %v259 = vpack.c.b16 %v237, %v236
    %v260 = vpack.c.b16 %v239, %v238
    %v261 = vpack.c.b16 %v241, %v240
    %v262 = vpack.c.b16 %v243, %v242
    %v263 = vpack.c.b16 %v245, %v244
    %v264 = vpack.c.b16 %v247, %v246
    %v265 = vpack.c.b16 %v249, %v248
    %vm266 = vcmask 23552
    %v268 = vsel %vm266, %v250, 0
    %v271 = vsel %vm266, %v251, 0
    %v274 = vsel %vm266, %v252, 0
    %v277 = vsel %vm266, %v253, 0
    %v280 = vsel %vm266, %v254, 0
    %v283 = vsel %vm266, %v255, 0
    %v286 = vsel %vm266, %v256, 0
    %v289 = vsel %vm266, %v257, 0
    %v292 = vsel %vm266, %v258, 0
    %v295 = vsel %vm266, %v259, 0
    %v298 = vsel %vm266, %v260, 0
    %v301 = vsel %vm266, %v261, 0
    %v304 = vsel %vm266, %v262, 0
    %v307 = vsel %vm266, %v263, 0
    %v310 = vsel %vm266, %v264, 0
    %v313 = vsel %vm266, %v265, 0
    %vm315 = vcmask 1040384
    %vm316 = vcmask 1041408
    %v317 = vsel %vm315, 4294967295, 65535
    %v318 = vsel %vm316, %v317, 0
    %v320 = vand.u32 %v178, %v318
    %322 = vmatprep.subr.bf16.mxu0 0
    %323 = vmatpush1.bf16.msra.mxu0 %v320
    %324 = vmatprep.subr.bf16.mxu0 0
    %325 = vmatpush1.bf16.msra.mxu0 0
    %326 = vmatprep.subr.bf16.mxu0 0
    %327 = vmatpush1.bf16.msra.mxu0 0
    %328 = vmatprep.subr.bf16.mxu0 0
    %329 = vmatpush1.bf16.msra.mxu0 0
    %330 = vmatprep.subr.bf16.mxu0 0
    %331 = vmatpush1.bf16.msra.mxu0 0
    %332 = vmatprep.subr.bf16.mxu0 0
    %333 = vmatpush1.bf16.msra.mxu0 0
    %334 = vmatprep.subr.bf16.mxu0 0
    %335 = vmatpush1.bf16.msra.mxu0 0
    %336 = vmatprep.subr.bf16.mxu0 0
    %337 = vmatpush1.bf16.msra.mxu0 0
    %338 = vmatprep.subr.bf16.mxu0 0
    %339 = vmatpush1.bf16.msra.mxu0 0
    %340 = vmatprep.subr.bf16.mxu0 0
    %341 = vmatpush1.bf16.msra.mxu0 0
    %342 = vmatprep.subr.bf16.mxu0 0
    %343 = vmatpush1.bf16.msra.mxu0 0
    %344 = vmatprep.subr.bf16.mxu0 0
    %345 = vmatpush1.bf16.msra.mxu0 0
    %346 = vmatprep.subr.bf16.mxu0 0
    %347 = vmatpush1.bf16.msra.mxu0 0
    %348 = vmatprep.subr.bf16.mxu0 0
    %349 = vmatpush1.bf16.msra.mxu0 0
    %350 = vmatprep.subr.bf16.mxu0 0
    %351 = vmatpush1.bf16.msra.mxu0 0
    %352 = vmatprep.subr.bf16.mxu0 0
    %353 = vmatpush1.bf16.msra.mxu0 0
    %354 = vmatprep.mubr.bf16.mxu0 0
    %355 = vmatmul.mubr.bf16.gmra.mrb[0].mxu0 %v268
    %v356 = vpop.f32.mrb[0].mxu0
    %v357 = vadd.f32 %v184, %v356
    %v358 = vpop.f32.mrb[0].mxu0
    %v359 = vpop.f32.mrb[0].mxu0
    %v360 = vadd.f32 %v184, %v359
    %v361 = vpop.f32.mrb[0].mxu0
    %362 = vmatprep.mubr.bf16.mxu0 0
    %363 = vmatmul.mubr.bf16.gmra.mrb[0].mxu0 %v271
    %v364 = vpop.f32.mrb[0].mxu0
    %v365 = vadd.f32 %v184, %v364
    %v366 = vpop.f32.mrb[0].mxu0
    %v367 = vpop.f32.mrb[0].mxu0
    %v368 = vadd.f32 %v184, %v367
    %v369 = vpop.f32.mrb[0].mxu0
    %370 = vmatprep.mubr.bf16.mxu0 0
    %371 = vmatmul.mubr.bf16.gmra.mrb[0].mxu0 %v274
    %v372 = vpop.f32.mrb[0].mxu0
    %v373 = vadd.f32 %v184, %v372
    %v374 = vpop.f32.mrb[0].mxu0
    %v375 = vpop.f32.mrb[0].mxu0
    %v376 = vadd.f32 %v184, %v375
    %v377 = vpop.f32.mrb[0].mxu0
    %378 = vmatprep.mubr.bf16.mxu0 0
    %379 = vmatmul.mubr.bf16.gmra.mrb[0].mxu0 %v277
    %v380 = vpop.f32.mrb[0].mxu0
    %v381 = vadd.f32 %v184, %v380
    %v382 = vpop.f32.mrb[0].mxu0
    %v383 = vpop.f32.mrb[0].mxu0
    %v384 = vadd.f32 %v184, %v383
    %v385 = vpop.f32.mrb[0].mxu0
    %386 = vmatprep.mubr.bf16.mxu0 0
    %387 = vmatmul.mubr.bf16.gmra.mrb[0].mxu0 %v280
    %v388 = vpop.f32.mrb[0].mxu0
    %v389 = vadd.f32 %v184, %v388
    %v390 = vpop.f32.mrb[0].mxu0
    %v391 = vpop.f32.mrb[0].mxu0
    %v392 = vadd.f32 %v184, %v391
    %v393 = vpop.f32.mrb[0].mxu0
    %394 = vmatprep.mubr.bf16.mxu0 0
    %395 = vmatmul.mubr.bf16.gmra.mrb[0].mxu0 %v283
    %v396 = vpop.f32.mrb[0].mxu0
    %v397 = vadd.f32 %v184, %v396
    %v398 = vpop.f32.mrb[0].mxu0
    %v399 = vpop.f32.mrb[0].mxu0
    %v400 = vadd.f32 %v184, %v399
    %v401 = vpop.f32.mrb[0].mxu0
    %402 = vmatprep.mubr.bf16.mxu0 0
    %403 = vmatmul.mubr.bf16.gmra.mrb[0].mxu0 %v286
    %v404 = vpop.f32.mrb[0].mxu0
    %v405 = vadd.f32 %v184, %v404
    %v406 = vpop.f32.mrb[0].mxu0
    %v407 = vpop.f32.mrb[0].mxu0
    %v408 = vadd.f32 %v184, %v407
    %v409 = vpop.f32.mrb[0].mxu0
    %410 = vmatprep.mubr.bf16.mxu0 0
    %411 = vmatmul.mubr.bf16.gmra.mrb[0].mxu0 %v289
    %v412 = vpop.f32.mrb[0].mxu0
    %v413 = vadd.f32 %v184, %v412
    %v414 = vpop.f32.mrb[0].mxu0
    %v415 = vpop.f32.mrb[0].mxu0
    %v416 = vadd.f32 %v184, %v415
    %v417 = vpop.f32.mrb[0].mxu0
    %418 = vmatprep.mubr.bf16.mxu0 0
    %419 = vmatmul.mubr.bf16.gmra.mrb[0].mxu0 %v292
    %v420 = vpop.f32.mrb[0].mxu0
    %v421 = vadd.f32 %v184, %v420
    %v422 = vpop.f32.mrb[0].mxu0
    %v423 = vpop.f32.mrb[0].mxu0
    %v424 = vadd.f32 %v184, %v423
    %v425 = vpop.f32.mrb[0].mxu0
    %426 = vmatprep.mubr.bf16.mxu0 0
    %427 = vmatmul.mubr.bf16.gmra.mrb[0].mxu0 %v295
    %v428 = vpop.f32.mrb[0].mxu0
    %v429 = vadd.f32 %v184, %v428
    %v430 = vpop.f32.mrb[0].mxu0
    %v431 = vpop.f32.mrb[0].mxu0
    %v432 = vadd.f32 %v184, %v431
    %v433 = vpop.f32.mrb[0].mxu0
    %434 = vmatprep.mubr.bf16.mxu0 0
    %435 = vmatmul.mubr.bf16.gmra.mrb[0].mxu0 %v298
    %v436 = vpop.f32.mrb[0].mxu0
    %v437 = vadd.f32 %v184, %v436
    %v438 = vpop.f32.mrb[0].mxu0
    %v439 = vpop.f32.mrb[0].mxu0
    %v440 = vadd.f32 %v184, %v439
    %v441 = vpop.f32.mrb[0].mxu0
    %442 = vmatprep.mubr.bf16.mxu0 0
    %443 = vmatmul.mubr.bf16.gmra.mrb[0].mxu0 %v301
    %v444 = vpop.f32.mrb[0].mxu0
    %v445 = vadd.f32 %v184, %v444
    %v446 = vpop.f32.mrb[0].mxu0
    %v447 = vpop.f32.mrb[0].mxu0
    %v448 = vadd.f32 %v184, %v447
    %v449 = vpop.f32.mrb[0].mxu0
    %450 = vmatprep.mubr.bf16.mxu0 0
    %451 = vmatmul.mubr.bf16.gmra.mrb[0].mxu0 %v304
    %v452 = vpop.f32.mrb[0].mxu0
    %v453 = vadd.f32 %v184, %v452
    %v454 = vpop.f32.mrb[0].mxu0
    %v455 = vpop.f32.mrb[0].mxu0
    %v456 = vadd.f32 %v184, %v455
    %v457 = vpop.f32.mrb[0].mxu0
    %458 = vmatprep.mubr.bf16.mxu0 0
    %459 = vmatmul.mubr.bf16.gmra.mrb[0].mxu0 %v307
    %v460 = vpop.f32.mrb[0].mxu0
    %v461 = vadd.f32 %v184, %v460
    %v462 = vpop.f32.mrb[0].mxu0
    %v463 = vpop.f32.mrb[0].mxu0
    %v464 = vadd.f32 %v184, %v463
    %v465 = vpop.f32.mrb[0].mxu0
    %466 = vmatprep.mubr.bf16.mxu0 0
    %467 = vmatmul.mubr.bf16.gmra.mrb[0].mxu0 %v310
    %v468 = vpop.f32.mrb[0].mxu0
    %v469 = vadd.f32 %v184, %v468
    %v470 = vpop.f32.mrb[0].mxu0
    %v471 = vpop.f32.mrb[0].mxu0
    %v472 = vadd.f32 %v184, %v471
    %v473 = vpop.f32.mrb[0].mxu0
    %474 = vmatprep.mubr.bf16.mxu0 0
    %475 = vmatmul.mubr.bf16.gmra.mrb[0].mxu0 %v313
    %v476 = vpop.f32.mrb[0].mxu0
    %v477 = vadd.f32 %v184, %v476
    %v478 = vpop.f32.mrb[0].mxu0
    %v479 = vpop.f32.mrb[0].mxu0
    %v480 = vadd.f32 %v184, %v479
    %v481 = vpop.f32.mrb[0].mxu0
    %482 = vdwg.mxu0
    %v483 = vmax.f32 %v357, 0.0
    %v484 = vmax.f32 %v360, 0.0
    %v485 = vmax.f32 %v365, 0.0
    %v486 = vmax.f32 %v368, 0.0
    %v487 = vmax.f32 %v373, 0.0
    %v488 = vmax.f32 %v376, 0.0
    %v489 = vmax.f32 %v381, 0.0
    %v490 = vmax.f32 %v384, 0.0
    %v491 = vmax.f32 %v389, 0.0
    %v492 = vmax.f32 %v392, 0.0
    %v493 = vmax.f32 %v397, 0.0
    %v494 = vmax.f32 %v400, 0.0
    %v495 = vmax.f32 %v405, 0.0
    %v496 = vmax.f32 %v408, 0.0
    %v497 = vmax.f32 %v413, 0.0
    %v498 = vmax.f32 %v416, 0.0
    %v499 = vmax.f32 %v421, 0.0
    %v500 = vmax.f32 %v424, 0.0
    %v501 = vmax.f32 %v429, 0.0
    %v502 = vmax.f32 %v432, 0.0
    %v503 = vmax.f32 %v437, 0.0
    %v504 = vmax.f32 %v440, 0.0
    %v505 = vmax.f32 %v445, 0.0
    %v506 = vmax.f32 %v448, 0.0
    %v507 = vmax.f32 %v453, 0.0
    %v508 = vmax.f32 %v456, 0.0
    %v509 = vmax.f32 %v461, 0.0
    %v510 = vmax.f32 %v464, 0.0
    %v511 = vmax.f32 %v469, 0.0
    %v512 = vmax.f32 %v472, 0.0
    %v513 = vmax.f32 %v477, 0.0
    %v514 = vmax.f32 %v480, 0.0
    %v515 = vpack.c.bf16 %v484, %v483
    %v516 = vpack.c.bf16 %v486, %v485
    %v517 = vpack.c.bf16 %v488, %v487
    %v518 = vpack.c.bf16 %v490, %v489
    %v519 = vpack.c.bf16 %v492, %v491
    %v520 = vpack.c.bf16 %v494, %v493
    %v521 = vpack.c.bf16 %v496, %v495
    %v522 = vpack.c.bf16 %v498, %v497
    %v523 = vpack.c.bf16 %v500, %v499
    %v524 = vpack.c.bf16 %v502, %v501
    %v525 = vpack.c.bf16 %v504, %v503
    %v526 = vpack.c.bf16 %v506, %v505
    %v527 = vpack.c.bf16 %v508, %v507
    %v528 = vpack.c.bf16 %v510, %v509
    %v529 = vpack.c.bf16 %v512, %v511
    %v530 = vpack.c.bf16 %v514, %v513
    %v531 = vld [vmem:[#allocation8] sm:$0xf]
    %v532 = vld [vmem:[#allocation8 + $0x4] sm:$0xf]
    %v533 = vld [vmem:[#allocation8 + $0x8] sm:$0xf]
    %v534 = vld [vmem:[#allocation8 + $0xc] sm:$0xf]
    %v535 = vld [vmem:[#allocation8 + $0x10] sm:$0xf]
    %v536 = vld [vmem:[#allocation8 + $0x14] sm:$0xf]
    %v537 = vld [vmem:[#allocation8 + $0x18] sm:$0xf]
    %v538 = vld [vmem:[#allocation8 + $0x1c] sm:$0xf]
    %v539 = vld [vmem:[#allocation10] sm:$0x1]
    %v541 = vlaneseq
    %v542 = vshrl.u32 %v541, 7
    %v543 = vsub.s32 0, %v542
    %v544 = vrot.slane %v539, %v543
    %v554 = vunpack.c.l.b16 %v531
    %v555 = vunpack.c.l.b16 %v532
    %v556 = vunpack.c.l.b16 %v533
    %v557 = vunpack.c.l.b16 %v534
    %v558 = vunpack.c.l.b16 %v535
    %v559 = vunpack.c.l.b16 %v536
    %v560 = vunpack.c.l.b16 %v537
    %v561 = vunpack.c.l.b16 %v538
    %v562 = vpack.c.b16 %v555, %v554
    %v563 = vpack.c.b16 %v557, %v556
    %v564 = vpack.c.b16 %v559, %v558
    %v565 = vpack.c.b16 %v561, %v560
    %vm570 = vcmask 523264
    %v572 = vsel %vm570, %v515, 0
    %v575 = vsel %vm570, %v516, 0
    %v578 = vsel %vm570, %v517, 0
    %v581 = vsel %vm570, %v518, 0
    %v584 = vsel %vm570, %v519, 0
    %v587 = vsel %vm570, %v520, 0
    %v590 = vsel %vm570, %v521, 0
    %v593 = vsel %vm570, %v522, 0
    %v596 = vsel %vm570, %v523, 0
    %v599 = vsel %vm570, %v524, 0
    %v602 = vsel %vm570, %v525, 0
    %v605 = vsel %vm570, %v526, 0
    %v608 = vsel %vm570, %v527, 0
    %v611 = vsel %vm570, %v528, 0
    %v614 = vsel %vm570, %v529, 0
    %v617 = vsel %vm570, %v530, 0
    %619 = vmatprep.subr.bf16.mxu0 0
    %620 = vmatpush1.bf16.msra.mxu0 %v562
    %621 = vmatprep.subr.bf16.mxu0 0
    %622 = vmatpush1.bf16.msra.mxu0 %v563
    %623 = vmatprep.subr.bf16.mxu0 0
    %624 = vmatpush1.bf16.msra.mxu0 %v564
    %625 = vmatprep.subr.bf16.mxu0 0
    %626 = vmatpush1.bf16.msra.mxu0 %v565
    %627 = vmatprep.subr.bf16.mxu0 0
    %628 = vmatpush1.bf16.msra.mxu0 0
    %629 = vmatprep.subr.bf16.mxu0 0
    %630 = vmatpush1.bf16.msra.mxu0 0
    %631 = vmatprep.subr.bf16.mxu0 0
    %632 = vmatpush1.bf16.msra.mxu0 0
    %633 = vmatprep.subr.bf16.mxu0 0
    %634 = vmatpush1.bf16.msra.mxu0 0
    %635 = vmatprep.subr.bf16.mxu0 0
    %636 = vmatpush1.bf16.msra.mxu0 0
    %637 = vmatprep.subr.bf16.mxu0 0
    %638 = vmatpush1.bf16.msra.mxu0 0
    %639 = vmatprep.subr.bf16.mxu0 0
    %640 = vmatpush1.bf16.msra.mxu0 0
    %641 = vmatprep.subr.bf16.mxu0 0
    %642 = vmatpush1.bf16.msra.mxu0 0
    %643 = vmatprep.subr.bf16.mxu0 0
    %644 = vmatpush1.bf16.msra.mxu0 0
    %645 = vmatprep.subr.bf16.mxu0 0
    %646 = vmatpush1.bf16.msra.mxu0 0
    %647 = vmatprep.subr.bf16.mxu0 0
    %648 = vmatpush1.bf16.msra.mxu0 0
    %649 = vmatprep.subr.bf16.mxu0 0
    %650 = vmatpush1.bf16.msra.mxu0 0
    %651 = vmatprep.mubr.bf16.mxu0 0
    %652 = vmatmul.mubr.bf16.gmra.mrb[0].mxu0 %v572
    %v653 = vpop.f32.mrb[0].mxu0
    %v654 = vadd.f32 %v544, %v653
    %v655 = vpop.f32.mrb[0].mxu0
    %v656 = vpop.f32.mrb[0].mxu0
    %v657 = vadd.f32 %v544, %v656
    %v658 = vpop.f32.mrb[0].mxu0
    %659 = vmatprep.mubr.bf16.mxu0 0
    %660 = vmatmul.mubr.bf16.gmra.mrb[0].mxu0 %v575
    %v661 = vpop.f32.mrb[0].mxu0
    %v662 = vadd.f32 %v544, %v661
    %v663 = vpop.f32.mrb[0].mxu0
    %v664 = vpop.f32.mrb[0].mxu0
    %v665 = vadd.f32 %v544, %v664
    %v666 = vpop.f32.mrb[0].mxu0
    %667 = vmatprep.mubr.bf16.mxu0 0
    %668 = vmatmul.mubr.bf16.gmra.mrb[0].mxu0 %v578
    %v669 = vpop.f32.mrb[0].mxu0
    %v670 = vadd.f32 %v544, %v669
    %v671 = vpop.f32.mrb[0].mxu0
    %v672 = vpop.f32.mrb[0].mxu0
    %v673 = vadd.f32 %v544, %v672
    %v674 = vpop.f32.mrb[0].mxu0
    %675 = vmatprep.mubr.bf16.mxu0 0
    %676 = vmatmul.mubr.bf16.gmra.mrb[0].mxu0 %v581
    %v677 = vpop.f32.mrb[0].mxu0
    %v678 = vadd.f32 %v544, %v677
    %v679 = vpop.f32.mrb[0].mxu0
    %v680 = vpop.f32.mrb[0].mxu0
    %v681 = vadd.f32 %v544, %v680
    %v682 = vpop.f32.mrb[0].mxu0
    %683 = vmatprep.mubr.bf16.mxu0 0
    %684 = vmatmul.mubr.bf16.gmra.mrb[0].mxu0 %v584
    %v685 = vpop.f32.mrb[0].mxu0
    %v686 = vadd.f32 %v544, %v685
    %v687 = vpop.f32.mrb[0].mxu0
    %v688 = vpop.f32.mrb[0].mxu0
    %v689 = vadd.f32 %v544, %v688
    %v690 = vpop.f32.mrb[0].mxu0
    %691 = vmatprep.mubr.bf16.mxu0 0
    %692 = vmatmul.mubr.bf16.gmra.mrb[0].mxu0 %v587
    %v693 = vpop.f32.mrb[0].mxu0
    %v694 = vadd.f32 %v544, %v693
    %v695 = vpop.f32.mrb[0].mxu0
    %v696 = vpop.f32.mrb[0].mxu0
    %v697 = vadd.f32 %v544, %v696
    %v698 = vpop.f32.mrb[0].mxu0
    %699 = vmatprep.mubr.bf16.mxu0 0
    %700 = vmatmul.mubr.bf16.gmra.mrb[0].mxu0 %v590
    %v701 = vpop.f32.mrb[0].mxu0
    %v702 = vadd.f32 %v544, %v701
    %v703 = vpop.f32.mrb[0].mxu0
    %v704 = vpop.f32.mrb[0].mxu0
    %v705 = vadd.f32 %v544, %v704
    %v706 = vpop.f32.mrb[0].mxu0
    %707 = vmatprep.mubr.bf16.mxu0 0
    %708 = vmatmul.mubr.bf16.gmra.mrb[0].mxu0 %v593
    %v709 = vpop.f32.mrb[0].mxu0
    %v710 = vadd.f32 %v544, %v709
    %v711 = vpop.f32.mrb[0].mxu0
    %v712 = vpop.f32.mrb[0].mxu0
    %v713 = vadd.f32 %v544, %v712
    %v714 = vpop.f32.mrb[0].mxu0
    %715 = vmatprep.mubr.bf16.mxu0 0
    %716 = vmatmul.mubr.bf16.gmra.mrb[0].mxu0 %v596
    %v717 = vpop.f32.mrb[0].mxu0
    %v718 = vadd.f32 %v544, %v717
    %v719 = vpop.f32.mrb[0].mxu0
    %v720 = vpop.f32.mrb[0].mxu0
    %v721 = vadd.f32 %v544, %v720
    %v722 = vpop.f32.mrb[0].mxu0
    %723 = vmatprep.mubr.bf16.mxu0 0
    %724 = vmatmul.mubr.bf16.gmra.mrb[0].mxu0 %v599
    %v725 = vpop.f32.mrb[0].mxu0
    %v726 = vadd.f32 %v544, %v725
    %v727 = vpop.f32.mrb[0].mxu0
    %v728 = vpop.f32.mrb[0].mxu0
    %v729 = vadd.f32 %v544, %v728
    %v730 = vpop.f32.mrb[0].mxu0
    %731 = vmatprep.mubr.bf16.mxu0 0
    %732 = vmatmul.mubr.bf16.gmra.mrb[0].mxu0 %v602
    %v733 = vpop.f32.mrb[0].mxu0
    %v734 = vadd.f32 %v544, %v733
    %v735 = vpop.f32.mrb[0].mxu0
    %v736 = vpop.f32.mrb[0].mxu0
    %v737 = vadd.f32 %v544, %v736
    %v738 = vpop.f32.mrb[0].mxu0
    %739 = vmatprep.mubr.bf16.mxu0 0
    %740 = vmatmul.mubr.bf16.gmra.mrb[0].mxu0 %v605
    %v741 = vpop.f32.mrb[0].mxu0
    %v742 = vadd.f32 %v544, %v741
    %v743 = vpop.f32.mrb[0].mxu0
    %v744 = vpop.f32.mrb[0].mxu0
    %v745 = vadd.f32 %v544, %v744
    %v746 = vpop.f32.mrb[0].mxu0
    %747 = vmatprep.mubr.bf16.mxu0 0
    %748 = vmatmul.mubr.bf16.gmra.mrb[0].mxu0 %v608
    %v749 = vpop.f32.mrb[0].mxu0
    %v750 = vadd.f32 %v544, %v749
    %v751 = vpop.f32.mrb[0].mxu0
    %v752 = vpop.f32.mrb[0].mxu0
    %v753 = vadd.f32 %v544, %v752
    %v754 = vpop.f32.mrb[0].mxu0
    %755 = vmatprep.mubr.bf16.mxu0 0
    %756 = vmatmul.mubr.bf16.gmra.mrb[0].mxu0 %v611
    %v757 = vpop.f32.mrb[0].mxu0
    %v758 = vadd.f32 %v544, %v757
    %v759 = vpop.f32.mrb[0].mxu0
    %v760 = vpop.f32.mrb[0].mxu0
    %v761 = vadd.f32 %v544, %v760
    %v762 = vpop.f32.mrb[0].mxu0
    %763 = vmatprep.mubr.bf16.mxu0 0
    %764 = vmatmul.mubr.bf16.gmra.mrb[0].mxu0 %v614
    %v765 = vpop.f32.mrb[0].mxu0
    %v766 = vadd.f32 %v544, %v765
    %v767 = vpop.f32.mrb[0].mxu0
    %v768 = vpop.f32.mrb[0].mxu0
    %v769 = vadd.f32 %v544, %v768
    %v770 = vpop.f32.mrb[0].mxu0
    %771 = vmatprep.mubr.bf16.mxu0 0
    %772 = vmatmul.mubr.bf16.gmra.mrb[0].mxu0 %v617
    %v773 = vpop.f32.mrb[0].mxu0
    %v774 = vadd.f32 %v544, %v773
    %v775 = vpop.f32.mrb[0].mxu0
    %v776 = vpop.f32.mrb[0].mxu0
    %v777 = vadd.f32 %v544, %v776
    %v778 = vpop.f32.mrb[0].mxu0
    %779 = vdwg.mxu0
    %v780 = vmax.f32 %v654, 0.0
    %v781 = vmax.f32 %v657, 0.0
    %v782 = vmax.f32 %v662, 0.0
    %v783 = vmax.f32 %v665, 0.0
    %v784 = vmax.f32 %v670, 0.0
    %v785 = vmax.f32 %v673, 0.0
    %v786 = vmax.f32 %v678, 0.0
    %v787 = vmax.f32 %v681, 0.0
    %v788 = vmax.f32 %v686, 0.0
    %v789 = vmax.f32 %v689, 0.0
    %v790 = vmax.f32 %v694, 0.0
    %v791 = vmax.f32 %v697, 0.0
    %v792 = vmax.f32 %v702, 0.0
    %v793 = vmax.f32 %v705, 0.0
    %v794 = vmax.f32 %v710, 0.0
    %v795 = vmax.f32 %v713, 0.0
    %v796 = vmax.f32 %v718, 0.0
    %v797 = vmax.f32 %v721, 0.0
    %v798 = vmax.f32 %v726, 0.0
    %v799 = vmax.f32 %v729, 0.0
    %v800 = vmax.f32 %v734, 0.0
    %v801 = vmax.f32 %v737, 0.0
    %v802 = vmax.f32 %v742, 0.0
    %v803 = vmax.f32 %v745, 0.0
    %v804 = vmax.f32 %v750, 0.0
    %v805 = vmax.f32 %v753, 0.0
    %v806 = vmax.f32 %v758, 0.0
    %v807 = vmax.f32 %v761, 0.0
    %v808 = vmax.f32 %v766, 0.0
    %v809 = vmax.f32 %v769, 0.0
    %v810 = vmax.f32 %v774, 0.0
    %v811 = vmax.f32 %v777, 0.0
    %v812 = vpack.c.bf16 %v781, %v780
    %v813 = vpack.c.bf16 %v783, %v782
    %v814 = vpack.c.bf16 %v785, %v784
    %v815 = vpack.c.bf16 %v787, %v786
    %v816 = vpack.c.bf16 %v789, %v788
    %v817 = vpack.c.bf16 %v791, %v790
    %v818 = vpack.c.bf16 %v793, %v792
    %v819 = vpack.c.bf16 %v795, %v794
    %v820 = vpack.c.bf16 %v797, %v796
    %v821 = vpack.c.bf16 %v799, %v798
    %v822 = vpack.c.bf16 %v801, %v800
    %v823 = vpack.c.bf16 %v803, %v802
    %v824 = vpack.c.bf16 %v805, %v804
    %v825 = vpack.c.bf16 %v807, %v806
    %v826 = vpack.c.bf16 %v809, %v808
    %v827 = vpack.c.bf16 %v811, %v810
    %v828 = vld [vmem:[#allocation11] sm:$0xff]
    %v829 = vld [vmem:[#allocation11 + $0x8] sm:$0xff]
    %v830 = vld [vmem:[#allocation11 + $0x10] sm:$0xff]
    %v831 = vld [vmem:[#allocation11 + $0x18] sm:$0xff]
    %v832 = vld [vmem:[#allocation11 + $0x20] sm:$0xff]
    %v833 = vld [vmem:[#allocation11 + $0x28] sm:$0xff]
    %v834 = vld [vmem:[#allocation11 + $0x30] sm:$0xff]
    %v835 = vld [vmem:[#allocation11 + $0x38] sm:$0xff]
    %v836 = vld [vmem:[#allocation11 + $0x40] sm:$0xff]
    %v837 = vld [vmem:[#allocation11 + $0x48] sm:$0xff]
    %v838 = vld [vmem:[#allocation11 + $0x50] sm:$0xff]
    %v839 = vld [vmem:[#allocation11 + $0x58] sm:$0xff]
    %v840 = vld [vmem:[#allocation11 + $0x60] sm:$0xff]
    %v841 = vld [vmem:[#allocation11 + $0x68] sm:$0xff]
    %v842 = vld [vmem:[#allocation11 + $0x70] sm:$0xff]
    %v843 = vld [vmem:[#allocation11 + $0x78] sm:$0xff]
    %v860 = vunpack.c.l.b16 %v828
    %v861 = vunpack.c.h.b16 %v828
    %v862 = vunpack.c.l.b16 %v829
    %v863 = vunpack.c.h.b16 %v829
    %v864 = vunpack.c.l.b16 %v830
    %v865 = vunpack.c.h.b16 %v830
    %v866 = vunpack.c.l.b16 %v831
    %v867 = vunpack.c.h.b16 %v831
    %v868 = vunpack.c.l.b16 %v832
    %v869 = vunpack.c.h.b16 %v832
    %v870 = vunpack.c.l.b16 %v833
    %v871 = vunpack.c.h.b16 %v833
    %v872 = vunpack.c.l.b16 %v834
    %v873 = vunpack.c.h.b16 %v834
    %v874 = vunpack.c.l.b16 %v835
    %v875 = vunpack.c.h.b16 %v835
    %v876 = vunpack.c.l.b16 %v836
    %v877 = vunpack.c.h.b16 %v836
    %v878 = vunpack.c.l.b16 %v837
    %v879 = vunpack.c.h.b16 %v837
    %v880 = vunpack.c.l.b16 %v838
    %v881 = vunpack.c.h.b16 %v838
    %v882 = vunpack.c.l.b16 %v839
    %v883 = vunpack.c.h.b16 %v839
    %v884 = vunpack.c.l.b16 %v840
    %v885 = vunpack.c.h.b16 %v840
    %v886 = vunpack.c.l.b16 %v841
    %v887 = vunpack.c.h.b16 %v841
    %v888 = vunpack.c.l.b16 %v842
    %v889 = vunpack.c.h.b16 %v842
    %v890 = vunpack.c.l.b16 %v843
    %v891 = vunpack.c.h.b16 %v843
    %v892 = vpack.c.b16 %v862, %v860
    %v893 = vpack.c.b16 %v863, %v861
    %v894 = vpack.c.b16 %v866, %v864
    %v895 = vpack.c.b16 %v867, %v865
    %v896 = vpack.c.b16 %v870, %v868
    %v897 = vpack.c.b16 %v871, %v869
    %v898 = vpack.c.b16 %v874, %v872
    %v899 = vpack.c.b16 %v875, %v873
    %v900 = vpack.c.b16 %v878, %v876
    %v901 = vpack.c.b16 %v879, %v877
    %v902 = vpack.c.b16 %v882, %v880
    %v903 = vpack.c.b16 %v883, %v881
    %v904 = vpack.c.b16 %v886, %v884
    %v905 = vpack.c.b16 %v887, %v885
    %v906 = vpack.c.b16 %v890, %v888
    %v907 = vpack.c.b16 %v891, %v889
    %924 = vmatprep.subr.bf16.mxu0 %v893
    %925 = vmatpush1.bf16.msra.mxu0 %v892
    %926 = vmatprep.subr.bf16.mxu0 %v895
    %927 = vmatpush1.bf16.msra.mxu0 %v894
    %928 = vmatprep.subr.bf16.mxu0 %v897
    %929 = vmatpush1.bf16.msra.mxu0 %v896
    %930 = vmatprep.subr.bf16.mxu0 %v899
    %931 = vmatpush1.bf16.msra.mxu0 %v898
    %932 = vmatprep.subr.bf16.mxu0 %v901
    %933 = vmatpush1.bf16.msra.mxu0 %v900
    %934 = vmatprep.subr.bf16.mxu0 %v903
    %935 = vmatpush1.bf16.msra.mxu0 %v902
    %936 = vmatprep.subr.bf16.mxu0 %v905
    %937 = vmatpush1.bf16.msra.mxu0 %v904
    %938 = vmatprep.subr.bf16.mxu0 %v907
    %939 = vmatpush1.bf16.msra.mxu0 %v906
    %940 = vmatprep.subr.bf16.mxu0 0
    %941 = vmatpush1.bf16.msra.mxu0 0
    %942 = vmatprep.subr.bf16.mxu0 0
    %943 = vmatpush1.bf16.msra.mxu0 0
    %944 = vmatprep.subr.bf16.mxu0 0
    %945 = vmatpush1.bf16.msra.mxu0 0
    %946 = vmatprep.subr.bf16.mxu0 0
    %947 = vmatpush1.bf16.msra.mxu0 0
    %948 = vmatprep.subr.bf16.mxu0 0
    %949 = vmatpush1.bf16.msra.mxu0 0
    %950 = vmatprep.subr.bf16.mxu0 0
    %951 = vmatpush1.bf16.msra.mxu0 0
    %952 = vmatprep.subr.bf16.mxu0 0
    %953 = vmatpush1.bf16.msra.mxu0 0
    %954 = vmatprep.subr.bf16.mxu0 0
    %955 = vmatpush1.bf16.msra.mxu0 0
    %956 = vmatprep.mubr.bf16.mxu0 0
    %957 = vmatmul.mubr.bf16.gmra.mrb[0].mxu0 %v812
    %v958 = vpop.f32.mrb[0].mxu0
    %v959 = vadd.f32 0.0, %v958
    %v960 = vpop.f32.mrb[0].mxu0
    %v961 = vadd.f32 0.0, %v960
    %v962 = vpop.f32.mrb[0].mxu0
    %v963 = vadd.f32 0.0, %v962
    %v964 = vpop.f32.mrb[0].mxu0
    %v965 = vadd.f32 0.0, %v964
    %966 = vmatprep.mubr.bf16.mxu0 0
    %967 = vmatmul.mubr.bf16.gmra.mrb[0].mxu0 %v813
    %v968 = vpop.f32.mrb[0].mxu0
    %v969 = vadd.f32 0.0, %v968
    %v970 = vpop.f32.mrb[0].mxu0
    %v971 = vadd.f32 0.0, %v970
    %v972 = vpop.f32.mrb[0].mxu0
    %v973 = vadd.f32 0.0, %v972
    %v974 = vpop.f32.mrb[0].mxu0
    %v975 = vadd.f32 0.0, %v974
    %976 = vmatprep.mubr.bf16.mxu0 0
    %977 = vmatmul.mubr.bf16.gmra.mrb[0].mxu0 %v814
    %v978 = vpop.f32.mrb[0].mxu0
    %v979 = vadd.f32 0.0, %v978
    %v980 = vpop.f32.mrb[0].mxu0
    %v981 = vadd.f32 0.0, %v980
    %v982 = vpop.f32.mrb[0].mxu0
    %v983 = vadd.f32 0.0, %v982
    %v984 = vpop.f32.mrb[0].mxu0
    %v985 = vadd.f32 0.0, %v984
    %986 = vmatprep.mubr.bf16.mxu0 0
    %987 = vmatmul.mubr.bf16.gmra.mrb[0].mxu0 %v815
    %v988 = vpop.f32.mrb[0].mxu0
    %v989 = vadd.f32 0.0, %v988
    %v990 = vpop.f32.mrb[0].mxu0
    %v991 = vadd.f32 0.0, %v990
    %v992 = vpop.f32.mrb[0].mxu0
    %v993 = vadd.f32 0.0, %v992
    %v994 = vpop.f32.mrb[0].mxu0
    %v995 = vadd.f32 0.0, %v994
    %996 = vmatprep.mubr.bf16.mxu0 0
    %997 = vmatmul.mubr.bf16.gmra.mrb[0].mxu0 %v816
    %v998 = vpop.f32.mrb[0].mxu0
    %v999 = vadd.f32 0.0, %v998
    %v1000 = vpop.f32.mrb[0].mxu0
    %v1001 = vadd.f32 0.0, %v1000
    %v1002 = vpop.f32.mrb[0].mxu0
    %v1003 = vadd.f32 0.0, %v1002
    %v1004 = vpop.f32.mrb[0].mxu0
    %v1005 = vadd.f32 0.0, %v1004
    %1006 = vmatprep.mubr.bf16.mxu0 0
    %1007 = vmatmul.mubr.bf16.gmra.mrb[0].mxu0 %v817
    %v1008 = vpop.f32.mrb[0].mxu0
    %v1009 = vadd.f32 0.0, %v1008
    %v1010 = vpop.f32.mrb[0].mxu0
    %v1011 = vadd.f32 0.0, %v1010
    %v1012 = vpop.f32.mrb[0].mxu0
    %v1013 = vadd.f32 0.0, %v1012
    %v1014 = vpop.f32.mrb[0].mxu0
    %v1015 = vadd.f32 0.0, %v1014
    %1016 = vmatprep.mubr.bf16.mxu0 0
    %1017 = vmatmul.mubr.bf16.gmra.mrb[0].mxu0 %v818
    %v1018 = vpop.f32.mrb[0].mxu0
    %v1019 = vadd.f32 0.0, %v1018
    %v1020 = vpop.f32.mrb[0].mxu0
    %v1021 = vadd.f32 0.0, %v1020
    %v1022 = vpop.f32.mrb[0].mxu0
    %v1023 = vadd.f32 0.0, %v1022
    %v1024 = vpop.f32.mrb[0].mxu0
    %v1025 = vadd.f32 0.0, %v1024
    %1026 = vmatprep.mubr.bf16.mxu0 0
    %1027 = vmatmul.mubr.bf16.gmra.mrb[0].mxu0 %v819
    %v1028 = vpop.f32.mrb[0].mxu0
    %v1029 = vadd.f32 0.0, %v1028
    %v1030 = vpop.f32.mrb[0].mxu0
    %v1031 = vadd.f32 0.0, %v1030
    %v1032 = vpop.f32.mrb[0].mxu0
    %v1033 = vadd.f32 0.0, %v1032
    %v1034 = vpop.f32.mrb[0].mxu0
    %v1035 = vadd.f32 0.0, %v1034
    %1036 = vmatprep.mubr.bf16.mxu0 0
    %1037 = vmatmul.mubr.bf16.gmra.mrb[0].mxu0 %v820
    %v1038 = vpop.f32.mrb[0].mxu0
    %v1039 = vadd.f32 0.0, %v1038
    %v1040 = vpop.f32.mrb[0].mxu0
    %v1041 = vadd.f32 0.0, %v1040
    %v1042 = vpop.f32.mrb[0].mxu0
    %v1043 = vadd.f32 0.0, %v1042
    %v1044 = vpop.f32.mrb[0].mxu0
    %v1045 = vadd.f32 0.0, %v1044
    %1046 = vmatprep.mubr.bf16.mxu0 0
    %1047 = vmatmul.mubr.bf16.gmra.mrb[0].mxu0 %v821
    %v1048 = vpop.f32.mrb[0].mxu0
    %v1049 = vadd.f32 0.0, %v1048
    %v1050 = vpop.f32.mrb[0].mxu0
    %v1051 = vadd.f32 0.0, %v1050
    %v1052 = vpop.f32.mrb[0].mxu0
    %v1053 = vadd.f32 0.0, %v1052
    %v1054 = vpop.f32.mrb[0].mxu0
    %v1055 = vadd.f32 0.0, %v1054
    %1056 = vmatprep.mubr.bf16.mxu0 0
    %1057 = vmatmul.mubr.bf16.gmra.mrb[0].mxu0 %v822
    %v1058 = vpop.f32.mrb[0].mxu0
    %v1059 = vadd.f32 0.0, %v1058
    %v1060 = vpop.f32.mrb[0].mxu0
    %v1061 = vadd.f32 0.0, %v1060
    %v1062 = vpop.f32.mrb[0].mxu0
    %v1063 = vadd.f32 0.0, %v1062
    %v1064 = vpop.f32.mrb[0].mxu0
    %v1065 = vadd.f32 0.0, %v1064
    %1066 = vmatprep.mubr.bf16.mxu0 0
    %1067 = vmatmul.mubr.bf16.gmra.mrb[0].mxu0 %v823
    %v1068 = vpop.f32.mrb[0].mxu0
    %v1069 = vadd.f32 0.0, %v1068
    %v1070 = vpop.f32.mrb[0].mxu0
    %v1071 = vadd.f32 0.0, %v1070
    %v1072 = vpop.f32.mrb[0].mxu0
    %v1073 = vadd.f32 0.0, %v1072
    %v1074 = vpop.f32.mrb[0].mxu0
    %v1075 = vadd.f32 0.0, %v1074
    %1076 = vmatprep.mubr.bf16.mxu0 0
    %1077 = vmatmul.mubr.bf16.gmra.mrb[0].mxu0 %v824
    %v1078 = vpop.f32.mrb[0].mxu0
    %v1079 = vadd.f32 0.0, %v1078
    %v1080 = vpop.f32.mrb[0].mxu0
    %v1081 = vadd.f32 0.0, %v1080
    %v1082 = vpop.f32.mrb[0].mxu0
    %v1083 = vadd.f32 0.0, %v1082
    %v1084 = vpop.f32.mrb[0].mxu0
    %v1085 = vadd.f32 0.0, %v1084
    %1086 = vmatprep.mubr.bf16.mxu0 0
    %1087 = vmatmul.mubr.bf16.gmra.mrb[0].mxu0 %v825
    %v1088 = vpop.f32.mrb[0].mxu0
    %v1089 = vadd.f32 0.0, %v1088
    %v1090 = vpop.f32.mrb[0].mxu0
    %v1091 = vadd.f32 0.0, %v1090
    %v1092 = vpop.f32.mrb[0].mxu0
    %v1093 = vadd.f32 0.0, %v1092
    %v1094 = vpop.f32.mrb[0].mxu0
    %v1095 = vadd.f32 0.0, %v1094
    %1096 = vmatprep.mubr.bf16.mxu0 0
    %1097 = vmatmul.mubr.bf16.gmra.mrb[0].mxu0 %v826
    %v1098 = vpop.f32.mrb[0].mxu0
    %v1099 = vadd.f32 0.0, %v1098
    %v1100 = vpop.f32.mrb[0].mxu0
    %v1101 = vadd.f32 0.0, %v1100
    %v1102 = vpop.f32.mrb[0].mxu0
    %v1103 = vadd.f32 0.0, %v1102
    %v1104 = vpop.f32.mrb[0].mxu0
    %v1105 = vadd.f32 0.0, %v1104
    %1106 = vmatprep.mubr.bf16.mxu0 0
    %1107 = vmatmul.mubr.bf16.gmra.mrb[0].mxu0 %v827
    %v1108 = vpop.f32.mrb[0].mxu0
    %v1109 = vadd.f32 0.0, %v1108
    %v1110 = vpop.f32.mrb[0].mxu0
    %v1111 = vadd.f32 0.0, %v1110
    %v1112 = vpop.f32.mrb[0].mxu0
    %v1113 = vadd.f32 0.0, %v1112
    %v1114 = vpop.f32.mrb[0].mxu0
    %v1115 = vadd.f32 0.0, %v1114
    %1116 = vdwg.mxu0
    %v1117 = vmax.f32 %v959, %v963
    %v1118 = vmax.f32 %v1117, %v969
    %v1119 = vmax.f32 %v1118, %v973
    %v1120 = vmax.f32 %v1119, %v979
    %v1121 = vmax.f32 %v1120, %v983
    %v1122 = vmax.f32 %v1121, %v989
    %v1123 = vmax.f32 %v1122, %v993
    %v1124 = vmax.f32 %v1123, %v999
    %v1125 = vmax.f32 %v1124, %v1003
    %v1126 = vmax.f32 %v1125, %v1009
    %v1127 = vmax.f32 %v1126, %v1013
    %v1128 = vmax.f32 %v1127, %v1019
    %v1129 = vmax.f32 %v1128, %v1023
    %v1130 = vmax.f32 %v1129, %v1029
    %v1131 = vmax.f32 %v1130, %v1033
    %v1132 = vrot.slane %v1131, 4
    %v1133 = vmax.f32 %v1131, %v1132
    %v1134 = vrot.slane %v1133, 2
    %v1135 = vmax.f32 %v1133, %v1134
    %v1136 = vrot.slane %v1135, 1
    %v1137 = vmax.f32 %v1135, %v1136
    %v1138 = vmax.f32 %v961, %v965
    %v1139 = vmax.f32 %v1138, %v971
    %v1140 = vmax.f32 %v1139, %v975
    %v1141 = vmax.f32 %v1140, %v981
    %v1142 = vmax.f32 %v1141, %v985
    %v1143 = vmax.f32 %v1142, %v991
    %v1144 = vmax.f32 %v1143, %v995
    %v1145 = vmax.f32 %v1144, %v1001
    %v1146 = vmax.f32 %v1145, %v1005
    %v1147 = vmax.f32 %v1146, %v1011
    %v1148 = vmax.f32 %v1147, %v1015
    %v1149 = vmax.f32 %v1148, %v1021
    %v1150 = vmax.f32 %v1149, %v1025
    %v1151 = vmax.f32 %v1150, %v1031
    %v1152 = vmax.f32 %v1151, %v1035
    %v1153 = vrot.slane %v1152, 4
    %v1154 = vmax.f32 %v1152, %v1153
    %v1155 = vrot.slane %v1154, 2
    %v1156 = vmax.f32 %v1154, %v1155
    %v1157 = vrot.slane %v1156, 1
    %v1158 = vmax.f32 %v1156, %v1157
    %v1159 = vmax.f32 %v1039, %v1043
    %v1160 = vmax.f32 %v1159, %v1049
    %v1161 = vmax.f32 %v1160, %v1053
    %v1162 = vmax.f32 %v1161, %v1059
    %v1163 = vmax.f32 %v1162, %v1063
    %v1164 = vmax.f32 %v1163, %v1069
    %v1165 = vmax.f32 %v1164, %v1073
    %v1166 = vmax.f32 %v1165, %v1079
    %v1167 = vmax.f32 %v1166, %v1083
    %v1168 = vmax.f32 %v1167, %v1089
    %v1169 = vmax.f32 %v1168, %v1093
    %v1170 = vmax.f32 %v1169, %v1099
    %v1171 = vmax.f32 %v1170, %v1103
    %v1172 = vmax.f32 %v1171, %v1109
    %v1173 = vmax.f32 %v1172, %v1113
    %v1174 = vrot.slane %v1173, 4
    %v1175 = vmax.f32 %v1173, %v1174
    %v1176 = vrot.slane %v1175, 2
    %v1177 = vmax.f32 %v1175, %v1176
    %v1178 = vrot.slane %v1177, 1
    %v1179 = vmax.f32 %v1177, %v1178
    %v1180 = vmax.f32 %v1041, %v1045
    %v1181 = vmax.f32 %v1180, %v1051
    %v1182 = vmax.f32 %v1181, %v1055
    %v1183 = vmax.f32 %v1182, %v1061
    %v1184 = vmax.f32 %v1183, %v1065
    %v1185 = vmax.f32 %v1184, %v1071
    %v1186 = vmax.f32 %v1185, %v1075
    %v1187 = vmax.f32 %v1186, %v1081
    %v1188 = vmax.f32 %v1187, %v1085
    %v1189 = vmax.f32 %v1188, %v1091
    %v1190 = vmax.f32 %v1189, %v1095
    %v1191 = vmax.f32 %v1190, %v1101
    %v1192 = vmax.f32 %v1191, %v1105
    %v1193 = vmax.f32 %v1192, %v1111
    %v1194 = vmax.f32 %v1193, %v1115
    %v1195 = vrot.slane %v1194, 4
    %v1196 = vmax.f32 %v1194, %v1195
    %v1197 = vrot.slane %v1196, 2
    %v1198 = vmax.f32 %v1196, %v1197
    %v1199 = vrot.slane %v1198, 1
    %v1200 = vmax.f32 %v1198, %v1199
    %v1201 = vld [vmem:[#allocation13] sm:$0x3]
    %v1203 = vlaneseq
    %v1204 = vshrl.u32 %v1203, 7
    %v1205 = vsub.s32 0, %v1204
    %v1206 = vrot.slane %v1201, %v1205
    %v1207 = vlaneseq
    %v1208 = vshrl.u32 %v1207, 7
    %v1209 = vsub.s32 1, %v1208
    %v1210 = vrot.slane %v1201, %v1209
    %v1213 = vadd.f32 %v1137, %v1206
    %v1214 = vadd.f32 %v1158, %v1210
    %v1215 = vadd.f32 %v1179, %v1206
    %v1216 = vadd.f32 %v1200, %v1210
    %v1217 = vmax.f32 %v1213, 0.0
    %v1218 = vmax.f32 %v1214, 0.0
    %v1219 = vmax.f32 %v1215, 0.0
    %v1220 = vmax.f32 %v1216, 0.0
    %v1221 = vpack.c.bf16 %v1217, %v1217
    %v1222 = vpack.c.bf16 %v1218, %v1218
    %v1223 = vpack.c.bf16 %v1219, %v1219
    %v1224 = vpack.c.bf16 %v1220, %v1220
    %v1225 = vld [vmem:[#allocation14] sm:$0xff]
    %v1226 = vld [vmem:[#allocation14 + $0x8] sm:$0xff]
    %v1227 = vld [vmem:[#allocation14 + $0x10] sm:$0xff]
    %v1228 = vld [vmem:[#allocation14 + $0x18] sm:$0xff]
    %v1229 = vld [vmem:[#allocation14 + $0x20] sm:$0xff]
    %v1230 = vld [vmem:[#allocation14 + $0x28] sm:$0xff]
    %v1231 = vld [vmem:[#allocation14 + $0x30] sm:$0xff]
    %v1232 = vld [vmem:[#allocation14 + $0x38] sm:$0xff]
    %v1233 = vld [vmem:[#allocation14 + $0x40] sm:$0xff]
    %v1234 = vld [vmem:[#allocation14 + $0x48] sm:$0xff]
    %v1235 = vld [vmem:[#allocation14 + $0x50] sm:$0xff]
    %v1236 = vld [vmem:[#allocation14 + $0x58] sm:$0xff]
    %v1237 = vld [vmem:[#allocation14 + $0x60] sm:$0xff]
    %v1238 = vld [vmem:[#allocation14 + $0x68] sm:$0xff]
    %v1239 = vld [vmem:[#allocation14 + $0x70] sm:$0xff]
    %v1240 = vld [vmem:[#allocation14 + $0x78] sm:$0xff]
    %v1241 = vld [vmem:[#allocation14 + $0x80] sm:$0xff]
    %v1242 = vld [vmem:[#allocation14 + $0x88] sm:$0xff]
    %v1243 = vld [vmem:[#allocation14 + $0x90] sm:$0xff]
    %v1244 = vld [vmem:[#allocation14 + $0x98] sm:$0xff]
    %v1245 = vld [vmem:[#allocation14 + $0xa0] sm:$0xff]
    %v1246 = vld [vmem:[#allocation14 + $0xa8] sm:$0xff]
    %v1247 = vld [vmem:[#allocation14 + $0xb0] sm:$0xff]
    %v1248 = vld [vmem:[#allocation14 + $0xb8] sm:$0xff]
    %v1249 = vld [vmem:[#allocation14 + $0xc0] sm:$0xff]
    %v1250 = vld [vmem:[#allocation14 + $0xc8] sm:$0xff]
    %v1251 = vld [vmem:[#allocation14 + $0xd0] sm:$0xff]
    %v1252 = vld [vmem:[#allocation14 + $0xd8] sm:$0xff]
    %v1253 = vld [vmem:[#allocation14 + $0xe0] sm:$0xff]
    %v1254 = vld [vmem:[#allocation14 + $0xe8] sm:$0xff]
    %v1255 = vld [vmem:[#allocation14 + $0xf0] sm:$0xff]
    %v1256 = vld [vmem:[#allocation14 + $0xf8] sm:$0xff]
    %v1257 = vld [vmem:[#allocation16] sm:$0x3]
    %v1259 = vlaneseq
    %v1260 = vshrl.u32 %v1259, 7
    %v1261 = vsub.s32 0, %v1260
    %v1262 = vrot.slane %v1257, %v1261
    %v1263 = vlaneseq
    %v1264 = vshrl.u32 %v1263, 7
    %v1265 = vsub.s32 1, %v1264
    %v1266 = vrot.slane %v1257, %v1265
    %v1273 = vunpack.c.l.b16 %v1221
    %v1274 = vunpack.c.l.b16 %v1222
    %v1275 = vunpack.c.l.b16 %v1223
    %v1276 = vunpack.c.l.b16 %v1224
    %v1277 = vrot.slane %v1275, 7
    %vm1278 = vcmask 1041409
    %v1279 = vsel %vm1278, %v1277, %v1273
    %v1280 = vrot.slane %v1276, 7
    %v1281 = vsel %vm1278, %v1280, %v1274
    %v1282 = vpack.c.b16 %v1279, %v1279
    %v1283 = vpack.c.b16 %v1281, %v1281
    %v1318 = vunpack.c.l.b16 %v1225
    %v1319 = vunpack.c.h.b16 %v1225
    %v1320 = vunpack.c.l.b16 %v1226
    %v1321 = vunpack.c.h.b16 %v1226
    %v1322 = vunpack.c.l.b16 %v1227
    %v1323 = vunpack.c.h.b16 %v1227
    %v1324 = vunpack.c.l.b16 %v1228
    %v1325 = vunpack.c.h.b16 %v1228
    %v1326 = vunpack.c.l.b16 %v1229
    %v1327 = vunpack.c.h.b16 %v1229
    %v1328 = vunpack.c.l.b16 %v1230
    %v1329 = vunpack.c.h.b16 %v1230
    %v1330 = vunpack.c.l.b16 %v1231
    %v1331 = vunpack.c.h.b16 %v1231
    %v1332 = vunpack.c.l.b16 %v1232
    %v1333 = vunpack.c.h.b16 %v1232
    %v1334 = vunpack.c.l.b16 %v1233
    %v1335 = vunpack.c.h.b16 %v1233
    %v1336 = vunpack.c.l.b16 %v1234
    %v1337 = vunpack.c.h.b16 %v1234
    %v1338 = vunpack.c.l.b16 %v1235
    %v1339 = vunpack.c.h.b16 %v1235
    %v1340 = vunpack.c.l.b16 %v1236
    %v1341 = vunpack.c.h.b16 %v1236
    %v1342 = vunpack.c.l.b16 %v1237
    %v1343 = vunpack.c.h.b16 %v1237
    %v1344 = vunpack.c.l.b16 %v1238
    %v1345 = vunpack.c.h.b16 %v1238
    %v1346 = vunpack.c.l.b16 %v1239
    %v1347 = vunpack.c.h.b16 %v1239
    %v1348 = vunpack.c.l.b16 %v1240
    %v1349 = vunpack.c.h.b16 %v1240
    %v1350 = vunpack.c.l.b16 %v1241
    %v1351 = vunpack.c.h.b16 %v1241
    %v1352 = vunpack.c.l.b16 %v1242
    %v1353 = vunpack.c.h.b16 %v1242
    %v1354 = vunpack.c.l.b16 %v1243
    %v1355 = vunpack.c.h.b16 %v1243
    %v1356 = vunpack.c.l.b16 %v1244
    %v1357 = vunpack.c.h.b16 %v1244
    %v1358 = vunpack.c.l.b16 %v1245
    %v1359 = vunpack.c.h.b16 %v1245
    %v1360 = vunpack.c.l.b16 %v1246
    %v1361 = vunpack.c.h.b16 %v1246
    %v1362 = vunpack.c.l.b16 %v1247
    %v1363 = vunpack.c.h.b16 %v1247
    %v1364 = vunpack.c.l.b16 %v1248
    %v1365 = vunpack.c.h.b16 %v1248
    %v1366 = vunpack.c.l.b16 %v1249
    %v1367 = vunpack.c.h.b16 %v1249
    %v1368 = vunpack.c.l.b16 %v1250
    %v1369 = vunpack.c.h.b16 %v1250
    %v1370 = vunpack.c.l.b16 %v1251
    %v1371 = vunpack.c.h.b16 %v1251
    %v1372 = vunpack.c.l.b16 %v1252
    %v1373 = vunpack.c.h.b16 %v1252
    %v1374 = vunpack.c.l.b16 %v1253
    %v1375 = vunpack.c.h.b16 %v1253
    %v1376 = vunpack.c.l.b16 %v1254
    %v1377 = vunpack.c.h.b16 %v1254
    %v1378 = vunpack.c.l.b16 %v1255
    %v1379 = vunpack.c.h.b16 %v1255
    %v1380 = vunpack.c.l.b16 %v1256
    %v1381 = vunpack.c.h.b16 %v1256
    %v1382 = vpack.c.b16 %v1320, %v1318
    %v1383 = vpack.c.b16 %v1321, %v1319
    %v1384 = vpack.c.b16 %v1324, %v1322
    %v1385 = vpack.c.b16 %v1325, %v1323
    %v1386 = vpack.c.b16 %v1328, %v1326
    %v1387 = vpack.c.b16 %v1329, %v1327
    %v1388 = vpack.c.b16 %v1332, %v1330
    %v1389 = vpack.c.b16 %v1333, %v1331
    %v1390 = vpack.c.b16 %v1336, %v1334
    %v1391 = vpack.c.b16 %v1337, %v1335
    %v1392 = vpack.c.b16 %v1340, %v1338
    %v1393 = vpack.c.b16 %v1341, %v1339
    %v1394 = vpack.c.b16 %v1344, %v1342
    %v1395 = vpack.c.b16 %v1345, %v1343
    %v1396 = vpack.c.b16 %v1348, %v1346
    %v1397 = vpack.c.b16 %v1349, %v1347
    %v1398 = vpack.c.b16 %v1352, %v1350
    %v1399 = vpack.c.b16 %v1353, %v1351
    %v1400 = vpack.c.b16 %v1356, %v1354
    %v1401 = vpack.c.b16 %v1357, %v1355
    %v1402 = vpack.c.b16 %v1360, %v1358
    %v1403 = vpack.c.b16 %v1361, %v1359
    %v1404 = vpack.c.b16 %v1364, %v1362
    %v1405 = vpack.c.b16 %v1365, %v1363
    %v1406 = vpack.c.b16 %v1368, %v1366
    %v1407 = vpack.c.b16 %v1369, %v1367
    %v1408 = vpack.c.b16 %v1372, %v1370
    %v1409 = vpack.c.b16 %v1373, %v1371
    %v1410 = vpack.c.b16 %v1376, %v1374
    %v1411 = vpack.c.b16 %v1377, %v1375
    %v1412 = vpack.c.b16 %v1380, %v1378
    %v1413 = vpack.c.b16 %v1381, %v1379
    %1446 = vmatprep.subr.bf16.mxu0 %v1383
    %1447 = vmatpush1.bf16.msra.mxu0 %v1382
    %1448 = vmatprep.subr.bf16.mxu0 %v1385
    %1449 = vmatpush1.bf16.msra.mxu0 %v1384
    %1450 = vmatprep.subr.bf16.mxu0 %v1387
    %1451 = vmatpush1.bf16.msra.mxu0 %v1386
    %1452 = vmatprep.subr.bf16.mxu0 %v1389
    %1453 = vmatpush1.bf16.msra.mxu0 %v1388
    %1454 = vmatprep.subr.bf16.mxu0 %v1391
    %1455 = vmatpush1.bf16.msra.mxu0 %v1390
    %1456 = vmatprep.subr.bf16.mxu0 %v1393
    %1457 = vmatpush1.bf16.msra.mxu0 %v1392
    %1458 = vmatprep.subr.bf16.mxu0 %v1395
    %1459 = vmatpush1.bf16.msra.mxu0 %v1394
    %1460 = vmatprep.subr.bf16.mxu0 %v1397
    %1461 = vmatpush1.bf16.msra.mxu0 %v1396
    %1462 = vmatprep.subr.bf16.mxu0 %v1399
    %1463 = vmatpush1.bf16.msra.mxu0 %v1398
    %1464 = vmatprep.subr.bf16.mxu0 %v1401
    %1465 = vmatpush1.bf16.msra.mxu0 %v1400
    %1466 = vmatprep.subr.bf16.mxu0 %v1403
    %1467 = vmatpush1.bf16.msra.mxu0 %v1402
    %1468 = vmatprep.subr.bf16.mxu0 %v1405
    %1469 = vmatpush1.bf16.msra.mxu0 %v1404
    %1470 = vmatprep.subr.bf16.mxu0 %v1407
    %1471 = vmatpush1.bf16.msra.mxu0 %v1406
    %1472 = vmatprep.subr.bf16.mxu0 %v1409
    %1473 = vmatpush1.bf16.msra.mxu0 %v1408
    %1474 = vmatprep.subr.bf16.mxu0 %v1411
    %1475 = vmatpush1.bf16.msra.mxu0 %v1410
    %1476 = vmatprep.subr.bf16.mxu0 %v1413
    %1477 = vmatpush1.bf16.msra.mxu0 %v1412
    %1478 = vmatprep.mubr.bf16.mxu0 %v1283
    %1479 = vmatmul.mubr.bf16.gmra.mrb[0].mxu0 %v1282
    %v1480 = vpop.f32.mrb[0].mxu0
    %v1481 = vadd.f32 %v1262, %v1480
    %v1482 = vpop.f32.mrb[0].mxu0
    %v1483 = vadd.f32 %v1266, %v1482
    %v1484 = vpop.f32.mrb[0].mxu0
    %v1485 = vpop.f32.mrb[0].mxu0
    %1486 = vdwg.mxu0
    %v1489 = vcombine.low %v1481, %v1483
    %v1491 = vunpack.c.l.s4 1966171168
    %v1492 = vunpack.c.0.s8 %v1491
    %v1493 = vlaneseq
    %v1494 = vshrl.u32 %v1493, 7
    %v1495 = vsub.s32 %v1492, %v1494
    %v1496 = vrot.slane %v1489, %v1495
    %v1497 = vcombine.high %v1496, %v1496
    %v1499 = vunpack.c.l.s4 1966171168
    %v1500 = vunpack.c.0.s8 %v1499
    %v1501 = vlaneseq
    %v1502 = vshrl.u32 %v1501, 7
    %v1503 = vsub.s32 %v1500, %v1502
    %v1504 = vrot.slane %v1496, %v1503
    %v1506 = vunpack.c.l.s4 1966171168
    %v1507 = vunpack.c.0.s8 %v1506
    %v1508 = vlaneseq
    %v1509 = vshrl.u32 %v1508, 7
    %v1510 = vsub.s32 %v1507, %v1509
    %v1511 = vrot.slane %v1497, %v1510
    %v1514 = vlaneseq
    %vm1515 = vcmp.ge.s32.totalorder %v1514, 0
    %vm1516 = vcmp.lt.s32.totalorder %v1514, 256
    %vm1517 = vmand %vm1515, %vm1516
    %1518 = vst.msk [vmem:[#allocation17] sm:$0x3] %vm1517, %v1504
    %1519 = vst.msk [vmem:[#allocation17 + $0x2] sm:$0x3] %vm1517, %v1511
    // Predicated region
    $region74: #{tpu_custom_call.1} parent=1 // pred_check
      _
    $region75: #{tpu_custom_call.1} parent=1 // pred_check_branch
      %1521 = sbr.rel (0) target = $region77
    $region76: #{tpu_custom_call.1} parent=1 // pred_region
      %s1523 = ssub.s32 64, 64
      %1524 = vsyncadd [#allocation4], %s1523
      %s1525 = sshll.u32 [#allocation17], 4
      %s1526 = int_to_ptr.vmem [resolvable:$true] %s1525
      %1531 = dma.vmem_to_hbm [thread:$0]  %s1526, 64, %s9, [#allocation4], 32, 32, 2
    $region77: #{tpu_custom_call.1} parent=1 // pred_fallthru
      _
    // Predicated region
    $region78: #{tpu_custom_call.1} parent=1 // pred_check
      _
    $region79: #{tpu_custom_call.1} parent=1 // pred_check_branch
      %1533 = sbr.rel (0) target = $region81
    $region80: #{tpu_custom_call.1} parent=1 // pred_region
      %1534 = dma.done [#allocation4], 64
    $region81: #{tpu_custom_call.1} parent=1 // pred_fallthru
      _
    %1535 = vsyncpa [#allocation3], 1
    %1536 = vsyncpa [#allocation6], 1
    %1537 = vsyncpa [#allocation9], 1
    %1538 = vsyncpa [#allocation12], 1
    %1539 = vsyncpa [#allocation15], 1
    %1540 = vsyncpa [#allocation4], 1

</llo_original>
